<compile_context>
chip_gen: v7x
topology: tpu7x:2x2x1
jax: 0.10.0
libtpu: 0.0.40
codegen_flags: <defaults>
</compile_context>

<pallas_src>
import jax
import jax.numpy as jnp
from jax.experimental import pallas as pl
from jax.experimental.pallas import tpu as pltpu

WX = 20
WY = 13
OUTPUT_SIZE = WY * WX * 13              # 3380, fixed by the final reshape
LANE = 128
O_PAD = ((OUTPUT_SIZE + LANE - 1) // LANE) * LANE   # 3456 = 27 * 128

# Above this batch the grid-less whole-problem-in-VMEM call starts pressing on
# the default scoped-VMEM limit (~18 KB of f32 x + f32 out per row), so we
# switch to a batch-tiled grid.  At B=2 the grid-less path is used.
_GRIDLESS_MAX_B = 1024
_TM = 512                               # batch tile for the gridded path


def _mlp_kernel(x_ref, w1_ref, b1_ref, w2_ref, b2_ref, o_ref):
    # In-kernel f32 -> bf16 activation cast (free VPU work; avoids a separate
    # XLA convert op in the wrapper).
    x = x_ref[...].astype(jnp.bfloat16)
    # fc1: bf16 MXU matmul with f32 accumulation, + bias, ReLU (f32 epilogue).
    h = jnp.dot(x, w1_ref[...], preferred_element_type=jnp.float32)
    h = jnp.maximum(h + b1_ref[...], 0.0)
    # fc2 on the lane-dense padded output width (pad cols are zero w/b -> 0).
    o = jnp.dot(h.astype(w2_ref.dtype), w2_ref[...],
                preferred_element_type=jnp.float32)
    o_ref[...] = jnp.maximum(o + b2_ref[...], 0.0).astype(o_ref.dtype)


def prepare_params(w1, b1, w2, b2):
    """One-time weight prep: bf16 cast + zero-pad fc2 to the lane-dense width.

    w1: (D, H) f32, b1: (1, H) f32, w2: (H, O) f32, b2: (1, O) f32
    """
    O = w2.shape[1]
    assert O == OUTPUT_SIZE, "fc2 output size must be wy*wx*13"
    pad = O_PAD - O
    w1p = w1.astype(jnp.bfloat16)
    w2p = jnp.pad(w2, ((0, 0), (0, pad))).astype(jnp.bfloat16)
    b2p = jnp.pad(b2, ((0, 0), (0, pad))).astype(jnp.float32)
    return w1p, b1.astype(jnp.float32), w2p, b2p


@jax.jit
def simple_forward(x, w1p, b1, w2p, b2p):
    """x: (B, C, H, W) f32; prepared params from prepare_params().
    Returns (B, WY, WX, 13) f32."""
    B = x.shape[0]
    x2d = x.reshape(B, -1)                  # torch: x.view(B, -1); stays f32
    D = x2d.shape[1]
    Hdim = w1p.shape[1]

    if B <= _GRIDLESS_MAX_B:
        # Whole problem lives in VMEM; single invocation, no grid / pipeline.
        vmem = pl.BlockSpec(memory_space=pltpu.MemorySpace.VMEM)
        flops = 2 * B * (D * Hdim + Hdim * O_PAD)
        bytes_accessed = (x2d.size * 4 + w1p.size * 2 + b1.size * 4
                          + w2p.size * 2 + b2p.size * 4 + B * O_PAD * 4)
        out_pad = pl.pallas_call(
            _mlp_kernel,
            out_shape=jax.ShapeDtypeStruct((B, O_PAD), jnp.float32),
            in_specs=[vmem, vmem, vmem, vmem, vmem],
            out_specs=vmem,
            cost_estimate=pl.CostEstimate(
                flops=flops, transcendentals=0, bytes_accessed=bytes_accessed),
        )(x2d, w1p, b1, w2p, b2p)
    else:
        # Batch-tiled path: pipeline x/out over a 1-D grid, keep weights
        # resident, shard the batch axis across TensorCores (v7x megacore).
        tm = _TM
        B_pad = ((B + tm - 1) // tm) * tm
        if B_pad != B:
            x2d = jnp.pad(x2d, ((0, B_pad - B), (0, 0)))
        flops = 2 * B_pad * (D * Hdim + Hdim * O_PAD)
        bytes_accessed = (B_pad * D * 4 + w1p.size * 2 + b1.size * 4
                          + w2p.size * 2 + b2p.size * 4 + B_pad * O_PAD * 4)
        out_pad = pl.pallas_call(
            _mlp_kernel,
            out_shape=jax.ShapeDtypeStruct((B_pad, O_PAD), jnp.float32),
            grid_spec=pltpu.PrefetchScalarGridSpec(
                num_scalar_prefetch=0,
                grid=(B_pad // tm,),
                in_specs=[
                    pl.BlockSpec((tm, D), lambda i: (i, 0)),       # x tile
                    pl.BlockSpec((D, Hdim), lambda i: (0, 0)),     # w1 resident
                    pl.BlockSpec((1, Hdim), lambda i: (0, 0)),     # b1 resident
                    pl.BlockSpec((Hdim, O_PAD), lambda i: (0, 0)),  # w2 resident
                    pl.BlockSpec((1, O_PAD), lambda i: (0, 0)),     # b2 resident
                ],
                out_specs=pl.BlockSpec((tm, O_PAD), lambda i: (i, 0)),
            ),
            compiler_params=pltpu.CompilerParams(
                dimension_semantics=("parallel",),
                vmem_limit_bytes=64 << 20),
            cost_estimate=pl.CostEstimate(
                flops=flops, transcendentals=0, bytes_accessed=bytes_accessed),
        )(x2d, w1p, b1, w2p, b2p)
        out_pad = out_pad[:B]

    # Drop the zero pad columns, then reshape as the torch module does.
    # (Kept outside the kernel: a 13-wide minor dim is inherently lane-hostile.)
    return out_pad[:, :OUTPUT_SIZE].reshape(B, WY, WX, 13)


def init_params(key, input_size, hidden_size, output_size):
    """Deterministic init matching torch.nn.Linear's U(-1/sqrt(fan_in), +...).
    Stored as (in, out) so the kernel does x @ W (== torch x @ W.T)."""
    k1, k2, k3, k4 = jax.random.split(key, 4)
    bound1 = 1.0 / jnp.sqrt(input_size)
    bound2 = 1.0 / jnp.sqrt(hidden_size)
    w1 = jax.random.uniform(k1, (input_size, hidden_size), jnp.float32,
                            -bound1, bound1)
    b1 = jax.random.uniform(k2, (1, hidden_size), jnp.float32, -bound1, bound1)
    w2 = jax.random.uniform(k3, (hidden_size, output_size), jnp.float32,
                            -bound2, bound2)
    b2 = jax.random.uniform(k4, (1, output_size), jnp.float32, -bound2, bound2)
    return w1, b1, w2, b2


def _bf16_reference(x, w1, b1, w2, b2):
    """Pure-JAX reference with the same bf16-weight / f32-accumulate numerics."""
    B = x.shape[0]
    x2d = x.reshape(B, -1)
    h = jnp.dot(x2d.astype(jnp.bfloat16), w1.astype(jnp.bfloat16),
                preferred_element_type=jnp.float32)
    h = jnp.maximum(h + b1, 0.0)
    o = jnp.dot(h.astype(jnp.bfloat16), w2.astype(jnp.bfloat16),
                preferred_element_type=jnp.float32)
    return jnp.maximum(o + b2, 0.0).reshape(B, WY, WX, 13)


if __name__ == "__main__":
    key = jax.random.PRNGKey(0)
    kx, kp, kx2 = jax.random.split(key, 3)

    # Small NCHW input consistent with the forward (flattened by view()).
    B, C, H, W = 2, 4, 16, 16
    input_size = C * H * W          # 1024
    hidden_size = 32
    output_size = OUTPUT_SIZE       # 3380 (forced by reshape to (B, 13, 20, 13))

    x = jax.random.normal(kx, (B, C, H, W), dtype=jnp.float32)
    w1, b1, w2, b2 = init_params(kp, input_size, hidden_size, output_size)
    w1p, b1p, w2p, b2p = prepare_params(w1, b1, w2, b2)

    # --- grid-less path (B=2) ---
    out = simple_forward(x, w1p, b1p, w2p, b2p)
    out = jax.block_until_ready(out)
    assert out.shape == (B, WY, WX, 13)

    # Reference 1: same numerics (bf16 weights/acts, f32 accumulate).
    ref_bf16 = _bf16_reference(x, w1, b1, w2, b2)
    assert jnp.allclose(out, ref_bf16, atol=5e-3, rtol=5e-3)

    # Reference 2: full f32 torch-equivalent semantics (looser tol due to the
    # intentional bf16 weight/activation cast inside the kernel).
    x2d = x.reshape(B, -1)
    ref_f32 = jnp.maximum(x2d @ w1 + b1, 0.0)
    ref_f32 = jnp.maximum(ref_f32 @ w2 + b2, 0.0).reshape(B, WY, WX, 13)
    assert jnp.allclose(out, ref_f32, atol=3e-2, rtol=3e-2)

    # --- batch-tiled path (exercised once so both code paths are verified) ---
    B_big = _GRIDLESS_MAX_B + _TM       # 1536 -> grid of 3 tiles, no padding
    x_big = jax.random.normal(kx2, (B_big, C, H, W), dtype=jnp.float32)
    out_big = simple_forward(x_big, w1p, b1p, w2p, b2p)
    out_big = jax.block_until_ready(out_big)
    assert out_big.shape == (B_big, WY, WX, 13)
    ref_big = _bf16_reference(x_big, w1, b1, w2, b2)
    assert jnp.allclose(out_big, ref_big, atol=5e-3, rtol=5e-3)

    print("KERNEL_OK")
</pallas_src>

<mosaic_0001>
module attributes {stable_mosaic.version = 11 : i64} {
  func.func @_mlp_kernel(%arg0: memref<2x1024xf32, #tpu.memory_space<vmem>>, %arg1: memref<1024x32xbf16, #tpu.memory_space<vmem>>, %arg2: memref<1x32xf32, #tpu.memory_space<vmem>>, %arg3: memref<32x3456xbf16, #tpu.memory_space<vmem>>, %arg4: memref<1x3456xf32, #tpu.memory_space<vmem>>, %arg5: memref<2x3456xf32, #tpu.memory_space<vmem>>) attributes {dimension_semantics = [], scalar_prefetch = 0 : i64, scratch_operands = 0 : i64, tpu.core_type = #tpu.core_type<tc>} {
    %c0 = arith.constant 0 : index
    %c0_0 = arith.constant 0 : index
    %0 = vector.load %arg0[%c0, %c0_0] : memref<2x1024xf32, #tpu.memory_space<vmem>>, vector<2x1024xf32>
    %1 = arith.truncf %0 : vector<2x1024xf32> to vector<2x1024xbf16>
    %c0_1 = arith.constant 0 : index
    %c0_2 = arith.constant 0 : index
    %2 = vector.load %arg1[%c0_1, %c0_2] : memref<1024x32xbf16, #tpu.memory_space<vmem>>, vector<1024x32xbf16>
    %cst = arith.constant dense<0.000000e+00> : vector<2x32xf32>
    %3 = tpu.matmul %1, %2, %cst {dimension_numbers = #tpu.dot_dimension_numbers<[1], [0], [0], [1], [0, 0, 1, 1], [], []>} : vector<2x1024xbf16>, vector<1024x32xbf16>, vector<2x32xf32> -> vector<2x32xf32>
    %c0_3 = arith.constant 0 : index
    %c0_4 = arith.constant 0 : index
    %4 = vector.load %arg2[%c0_3, %c0_4] : memref<1x32xf32, #tpu.memory_space<vmem>>, vector<1x32xf32>
    %5 = vector.broadcast %4 : vector<1x32xf32> to vector<2x32xf32>
    %6 = arith.addf %3, %5 : vector<2x32xf32>
    %cst_5 = arith.constant 0.000000e+00 : f32
    %7 = vector.broadcast %cst_5 : f32 to vector<2x32xf32>
    %8 = arith.maximumf %6, %7 : vector<2x32xf32>
    %9 = arith.truncf %8 : vector<2x32xf32> to vector<2x32xbf16>
    %c0_6 = arith.constant 0 : index
    %c0_7 = arith.constant 0 : index
    %10 = vector.load %arg3[%c0_6, %c0_7] : memref<32x3456xbf16, #tpu.memory_space<vmem>>, vector<32x3456xbf16>
    %cst_8 = arith.constant dense<0.000000e+00> : vector<2x3456xf32>
    %11 = tpu.matmul %9, %10, %cst_8 {dimension_numbers = #tpu.dot_dimension_numbers<[1], [0], [0], [1], [0, 0, 1, 1], [], []>} : vector<2x32xbf16>, vector<32x3456xbf16>, vector<2x3456xf32> -> vector<2x3456xf32>
    %c0_9 = arith.constant 0 : index
    %c0_10 = arith.constant 0 : index
    %12 = vector.load %arg4[%c0_9, %c0_10] : memref<1x3456xf32, #tpu.memory_space<vmem>>, vector<1x3456xf32>
    %13 = vector.broadcast %12 : vector<1x3456xf32> to vector<2x3456xf32>
    %14 = arith.addf %11, %13 : vector<2x3456xf32>
    %cst_11 = arith.constant 0.000000e+00 : f32
    %15 = vector.broadcast %cst_11 : f32 to vector<2x3456xf32>
    %16 = arith.maximumf %14, %15 : vector<2x3456xf32>
    %c0_12 = arith.constant 0 : index
    %c0_13 = arith.constant 0 : index
    %17 = vector.load %arg5[%c0_12, %c0_13] : memref<2x3456xf32, #tpu.memory_space<vmem>>, vector<2x3456xf32>
    tpu.vector_store %arg5[%c0_12, %c0_13], %16 {strides = array<i32>} : memref<2x3456xf32, #tpu.memory_space<vmem>>, vector<2x3456xf32>,
    return
  }
}

</mosaic_0001>

<llo_original>
// kernel: simple_forward.1
$region0: #{simple_forward.1}
  #allocation0 [shape = 'u32[]', space=smem, size = 0x4, offset = 0x4, fixed_abs, tag = 'smem constant byte address 0x4 - core index']
  #allocation1 [shape = 'u32[144,128]{1,0:T(1,128)}', space=vmem, size = 0x12000, scoped, tag = 'internal scratch']
  %s0 = inlined_call_operand.vmem [shape: f32[2,1024], index: 0, kind: input, shape index: {}]
  %s1 = inlined_call_operand.vmem [shape: bf16[1024,32], index: 1, kind: input, shape index: {}]
  %s2 = inlined_call_operand.vmem [shape: f32[1,32], index: 2, kind: input, shape index: {}]
  %s3 = inlined_call_operand.vmem [shape: bf16[32,3456], index: 3, kind: input, shape index: {}]
  %s4 = inlined_call_operand.vmem [shape: f32[1,3456], index: 4, kind: input, shape index: {}]
  %s5 = inlined_call_operand.vmem [shape: f32[2,3456], index: 5, kind: output, shape index: {}]
  %s6 = sld [smem:[#allocation0]]
  $region30: #{simple_forward.1} parent=0
    _
  %s8 = ssub.s32 1, %s6
  %s9 = scalar_select 0, %s8, %s6
  // Predicated region
  $region2: #{simple_forward.1} parent=0 // pred_check
    _
  $region3: #{simple_forward.1} parent=0 // pred_check_branch
    %11 = sbr.rel (0) target = $region5
  $region4: #{simple_forward.1} parent=0 // pred_region
    _
  $region5: #{simple_forward.1} parent=0 // pred_fallthru
    _
  // Predicated region
  $region6: #{simple_forward.1} parent=0 // pred_check
    _
  $region7: #{simple_forward.1} parent=0 // pred_check_branch
    %13 = sbr.rel (0) target = $region9
  $region8: #{simple_forward.1} parent=0 // pred_region
    _
  $region9: #{simple_forward.1} parent=0 // pred_fallthru
    _
  // Predicated region
  $region10: #{simple_forward.1} parent=0 // pred_check
    _
  $region11: #{simple_forward.1} parent=0 // pred_check_branch
    %15 = sbr.rel (0) target = $region13
  $region12: #{simple_forward.1} parent=0 // pred_region
    _
  $region13: #{simple_forward.1} parent=0 // pred_fallthru
    _
  // Predicated region
  $region14: #{simple_forward.1} parent=0 // pred_check
    _
  $region15: #{simple_forward.1} parent=0 // pred_check_branch
    %17 = sbr.rel (0) target = $region17
  $region16: #{simple_forward.1} parent=0 // pred_region
    _
  $region17: #{simple_forward.1} parent=0 // pred_fallthru
    _
  // Predicated region
  $region18: #{simple_forward.1} parent=0 // pred_check
    _
  $region19: #{simple_forward.1} parent=0 // pred_check_branch
    %19 = sbr.rel (0) target = $region21
  $region20: #{simple_forward.1} parent=0 // pred_region
    _
  $region21: #{simple_forward.1} parent=0 // pred_fallthru
    _
  %v21 = vld [vmem:[%s0] sm:$0xff]
  %v22 = vld [vmem:[%s0 + $0x8] sm:$0xff]
  %v25 = vcombine.high %v21, %v21
  %v27 = vunpack.c.l.s4 1983009808
  %v28 = vunpack.c.0.s8 %v27
  %v29 = vlaneseq
  %v30 = vshrl.u32 %v29, 7
  %v31 = vsub.s32 %v28, %v30
  %v32 = vrot.slane %v21, %v31
  %v34 = vunpack.c.l.s4 1983009808
  %v35 = vunpack.c.0.s8 %v34
  %v36 = vlaneseq
  %v37 = vshrl.u32 %v36, 7
  %v38 = vsub.s32 %v35, %v37
  %v39 = vrot.slane %v25, %v38
  %v40 = vcombine.high %v32, %v32
  %v41 = vcombine.high %v39, %v39
  %v42 = vcombine.high %v22, %v22
  %v44 = vunpack.c.l.s4 1983009808
  %v45 = vunpack.c.0.s8 %v44
  %v46 = vlaneseq
  %v47 = vshrl.u32 %v46, 7
  %v48 = vsub.s32 %v45, %v47
  %v49 = vrot.slane %v22, %v48
  %v51 = vunpack.c.l.s4 1983009808
  %v52 = vunpack.c.0.s8 %v51
  %v53 = vlaneseq
  %v54 = vshrl.u32 %v53, 7
  %v55 = vsub.s32 %v52, %v54
  %v56 = vrot.slane %v42, %v55
  %v57 = vcombine.high %v49, %v49
  %v58 = vcombine.high %v56, %v56
  %v67 = vpack.c.bf16 %v32, %v32
  %v68 = vpack.c.bf16 %v40, %v40
  %v69 = vpack.c.bf16 %v39, %v39
  %v70 = vpack.c.bf16 %v41, %v41
  %v71 = vpack.c.bf16 %v49, %v49
  %v72 = vpack.c.bf16 %v57, %v57
  %v73 = vpack.c.bf16 %v56, %v56
  %v74 = vpack.c.bf16 %v58, %v58
  %v75 = vld [vmem:[%s1] sm:$0xf]
  %v76 = vld [vmem:[%s1 + $0x4] sm:$0xf]
  %v77 = vld [vmem:[%s1 + $0x8] sm:$0xf]
  %v78 = vld [vmem:[%s1 + $0xc] sm:$0xf]
  %v79 = vld [vmem:[%s1 + $0x10] sm:$0xf]
  %v80 = vld [vmem:[%s1 + $0x14] sm:$0xf]
  %v81 = vld [vmem:[%s1 + $0x18] sm:$0xf]
  %v82 = vld [vmem:[%s1 + $0x1c] sm:$0xf]
  %v83 = vld [vmem:[%s1 + $0x20] sm:$0xf]
  %v84 = vld [vmem:[%s1 + $0x24] sm:$0xf]
  %v85 = vld [vmem:[%s1 + $0x28] sm:$0xf]
  %v86 = vld [vmem:[%s1 + $0x2c] sm:$0xf]
  %v87 = vld [vmem:[%s1 + $0x30] sm:$0xf]
  %v88 = vld [vmem:[%s1 + $0x34] sm:$0xf]
  %v89 = vld [vmem:[%s1 + $0x38] sm:$0xf]
  %v90 = vld [vmem:[%s1 + $0x3c] sm:$0xf]
  %v91 = vld [vmem:[%s1 + $0x40] sm:$0xf]
  %v92 = vld [vmem:[%s1 + $0x44] sm:$0xf]
  %v93 = vld [vmem:[%s1 + $0x48] sm:$0xf]
  %v94 = vld [vmem:[%s1 + $0x4c] sm:$0xf]
  %v95 = vld [vmem:[%s1 + $0x50] sm:$0xf]
  %v96 = vld [vmem:[%s1 + $0x54] sm:$0xf]
  %v97 = vld [vmem:[%s1 + $0x58] sm:$0xf]
  %v98 = vld [vmem:[%s1 + $0x5c] sm:$0xf]
  %v99 = vld [vmem:[%s1 + $0x60] sm:$0xf]
  %v100 = vld [vmem:[%s1 + $0x64] sm:$0xf]
  %v101 = vld [vmem:[%s1 + $0x68] sm:$0xf]
  %v102 = vld [vmem:[%s1 + $0x6c] sm:$0xf]
  %v103 = vld [vmem:[%s1 + $0x70] sm:$0xf]
  %v104 = vld [vmem:[%s1 + $0x74] sm:$0xf]
  %v105 = vld [vmem:[%s1 + $0x78] sm:$0xf]
  %v106 = vld [vmem:[%s1 + $0x7c] sm:$0xf]
  %v107 = vld [vmem:[%s1 + $0x80] sm:$0xf]
  %v108 = vld [vmem:[%s1 + $0x84] sm:$0xf]
  %v109 = vld [vmem:[%s1 + $0x88] sm:$0xf]
  %v110 = vld [vmem:[%s1 + $0x8c] sm:$0xf]
  %v111 = vld [vmem:[%s1 + $0x90] sm:$0xf]
  %v112 = vld [vmem:[%s1 + $0x94] sm:$0xf]
  %v113 = vld [vmem:[%s1 + $0x98] sm:$0xf]
  %v114 = vld [vmem:[%s1 + $0x9c] sm:$0xf]
  %v115 = vld [vmem:[%s1 + $0xa0] sm:$0xf]
  %v116 = vld [vmem:[%s1 + $0xa4] sm:$0xf]
  %v117 = vld [vmem:[%s1 + $0xa8] sm:$0xf]
  %v118 = vld [vmem:[%s1 + $0xac] sm:$0xf]
  %v119 = vld [vmem:[%s1 + $0xb0] sm:$0xf]
  %v120 = vld [vmem:[%s1 + $0xb4] sm:$0xf]
  %v121 = vld [vmem:[%s1 + $0xb8] sm:$0xf]
  %v122 = vld [vmem:[%s1 + $0xbc] sm:$0xf]
  %v123 = vld [vmem:[%s1 + $0xc0] sm:$0xf]
  %v124 = vld [vmem:[%s1 + $0xc4] sm:$0xf]
  %v125 = vld [vmem:[%s1 + $0xc8] sm:$0xf]
  %v126 = vld [vmem:[%s1 + $0xcc] sm:$0xf]
  %v127 = vld [vmem:[%s1 + $0xd0] sm:$0xf]
  %v128 = vld [vmem:[%s1 + $0xd4] sm:$0xf]
  %v129 = vld [vmem:[%s1 + $0xd8] sm:$0xf]
  %v130 = vld [vmem:[%s1 + $0xdc] sm:$0xf]
  %v131 = vld [vmem:[%s1 + $0xe0] sm:$0xf]
  %v132 = vld [vmem:[%s1 + $0xe4] sm:$0xf]
  %v133 = vld [vmem:[%s1 + $0xe8] sm:$0xf]
  %v134 = vld [vmem:[%s1 + $0xec] sm:$0xf]
  %v135 = vld [vmem:[%s1 + $0xf0] sm:$0xf]
  %v136 = vld [vmem:[%s1 + $0xf4] sm:$0xf]
  %v137 = vld [vmem:[%s1 + $0xf8] sm:$0xf]
  %v138 = vld [vmem:[%s1 + $0xfc] sm:$0xf]
  %v139 = vld [vmem:[%s1 + $0x100] sm:$0xf]
  %v140 = vld [vmem:[%s1 + $0x104] sm:$0xf]
  %v141 = vld [vmem:[%s1 + $0x108] sm:$0xf]
  %v142 = vld [vmem:[%s1 + $0x10c] sm:$0xf]
  %v143 = vld [vmem:[%s1 + $0x110] sm:$0xf]
  %v144 = vld [vmem:[%s1 + $0x114] sm:$0xf]
  %v145 = vld [vmem:[%s1 + $0x118] sm:$0xf]
  %v146 = vld [vmem:[%s1 + $0x11c] sm:$0xf]
  %v147 = vld [vmem:[%s1 + $0x120] sm:$0xf]
  %v148 = vld [vmem:[%s1 + $0x124] sm:$0xf]
  %v149 = vld [vmem:[%s1 + $0x128] sm:$0xf]
  %v150 = vld [vmem:[%s1 + $0x12c] sm:$0xf]
  %v151 = vld [vmem:[%s1 + $0x130] sm:$0xf]
  %v152 = vld [vmem:[%s1 + $0x134] sm:$0xf]
  %v153 = vld [vmem:[%s1 + $0x138] sm:$0xf]
  %v154 = vld [vmem:[%s1 + $0x13c] sm:$0xf]
  %v155 = vld [vmem:[%s1 + $0x140] sm:$0xf]
  %v156 = vld [vmem:[%s1 + $0x144] sm:$0xf]
  %v157 = vld [vmem:[%s1 + $0x148] sm:$0xf]
  %v158 = vld [vmem:[%s1 + $0x14c] sm:$0xf]
  %v159 = vld [vmem:[%s1 + $0x150] sm:$0xf]
  %v160 = vld [vmem:[%s1 + $0x154] sm:$0xf]
  %v161 = vld [vmem:[%s1 + $0x158] sm:$0xf]
  %v162 = vld [vmem:[%s1 + $0x15c] sm:$0xf]
  %v163 = vld [vmem:[%s1 + $0x160] sm:$0xf]
  %v164 = vld [vmem:[%s1 + $0x164] sm:$0xf]
  %v165 = vld [vmem:[%s1 + $0x168] sm:$0xf]
  %v166 = vld [vmem:[%s1 + $0x16c] sm:$0xf]
  %v167 = vld [vmem:[%s1 + $0x170] sm:$0xf]
  %v168 = vld [vmem:[%s1 + $0x174] sm:$0xf]
  %v169 = vld [vmem:[%s1 + $0x178] sm:$0xf]
  %v170 = vld [vmem:[%s1 + $0x17c] sm:$0xf]
  %v171 = vld [vmem:[%s1 + $0x180] sm:$0xf]
  %v172 = vld [vmem:[%s1 + $0x184] sm:$0xf]
  %v173 = vld [vmem:[%s1 + $0x188] sm:$0xf]
  %v174 = vld [vmem:[%s1 + $0x18c] sm:$0xf]
  %v175 = vld [vmem:[%s1 + $0x190] sm:$0xf]
  %v176 = vld [vmem:[%s1 + $0x194] sm:$0xf]
  %v177 = vld [vmem:[%s1 + $0x198] sm:$0xf]
  %v178 = vld [vmem:[%s1 + $0x19c] sm:$0xf]
  %v179 = vld [vmem:[%s1 + $0x1a0] sm:$0xf]
  %v180 = vld [vmem:[%s1 + $0x1a4] sm:$0xf]
  %v181 = vld [vmem:[%s1 + $0x1a8] sm:$0xf]
  %v182 = vld [vmem:[%s1 + $0x1ac] sm:$0xf]
  %v183 = vld [vmem:[%s1 + $0x1b0] sm:$0xf]
  %v184 = vld [vmem:[%s1 + $0x1b4] sm:$0xf]
  %v185 = vld [vmem:[%s1 + $0x1b8] sm:$0xf]
  %v186 = vld [vmem:[%s1 + $0x1bc] sm:$0xf]
  %v187 = vld [vmem:[%s1 + $0x1c0] sm:$0xf]
  %v188 = vld [vmem:[%s1 + $0x1c4] sm:$0xf]
  %v189 = vld [vmem:[%s1 + $0x1c8] sm:$0xf]
  %v190 = vld [vmem:[%s1 + $0x1cc] sm:$0xf]
  %v191 = vld [vmem:[%s1 + $0x1d0] sm:$0xf]
  %v192 = vld [vmem:[%s1 + $0x1d4] sm:$0xf]
  %v193 = vld [vmem:[%s1 + $0x1d8] sm:$0xf]
  %v194 = vld [vmem:[%s1 + $0x1dc] sm:$0xf]
  %v195 = vld [vmem:[%s1 + $0x1e0] sm:$0xf]
  %v196 = vld [vmem:[%s1 + $0x1e4] sm:$0xf]
  %v197 = vld [vmem:[%s1 + $0x1e8] sm:$0xf]
  %v198 = vld [vmem:[%s1 + $0x1ec] sm:$0xf]
  %v199 = vld [vmem:[%s1 + $0x1f0] sm:$0xf]
  %v200 = vld [vmem:[%s1 + $0x1f4] sm:$0xf]
  %v201 = vld [vmem:[%s1 + $0x1f8] sm:$0xf]
  %v202 = vld [vmem:[%s1 + $0x1fc] sm:$0xf]
  %v203 = vld [vmem:[%s2] sm:$0x1]
  %v205 = vlaneseq
  %v206 = vshrl.u32 %v205, 7
  %v207 = vsub.s32 0, %v206
  %v208 = vrot.slane %v203, %v207
  %v338 = vunpack.c.l.b16 %v75
  %v339 = vunpack.c.l.b16 %v76
  %v340 = vunpack.c.l.b16 %v77
  %v341 = vunpack.c.l.b16 %v78
  %v342 = vunpack.c.l.b16 %v79
  %v343 = vunpack.c.l.b16 %v80
  %v344 = vunpack.c.l.b16 %v81
  %v345 = vunpack.c.l.b16 %v82
  %v346 = vunpack.c.l.b16 %v83
  %v347 = vunpack.c.l.b16 %v84
  %v348 = vunpack.c.l.b16 %v85
  %v349 = vunpack.c.l.b16 %v86
  %v350 = vunpack.c.l.b16 %v87
  %v351 = vunpack.c.l.b16 %v88
  %v352 = vunpack.c.l.b16 %v89
  %v353 = vunpack.c.l.b16 %v90
  %v354 = vunpack.c.l.b16 %v91
  %v355 = vunpack.c.l.b16 %v92
  %v356 = vunpack.c.l.b16 %v93
  %v357 = vunpack.c.l.b16 %v94
  %v358 = vunpack.c.l.b16 %v95
  %v359 = vunpack.c.l.b16 %v96
  %v360 = vunpack.c.l.b16 %v97
  %v361 = vunpack.c.l.b16 %v98
  %v362 = vunpack.c.l.b16 %v99
  %v363 = vunpack.c.l.b16 %v100
  %v364 = vunpack.c.l.b16 %v101
  %v365 = vunpack.c.l.b16 %v102
  %v366 = vunpack.c.l.b16 %v103
  %v367 = vunpack.c.l.b16 %v104
  %v368 = vunpack.c.l.b16 %v105
  %v369 = vunpack.c.l.b16 %v106
  %v370 = vunpack.c.l.b16 %v107
  %v371 = vunpack.c.l.b16 %v108
  %v372 = vunpack.c.l.b16 %v109
  %v373 = vunpack.c.l.b16 %v110
  %v374 = vunpack.c.l.b16 %v111
  %v375 = vunpack.c.l.b16 %v112
  %v376 = vunpack.c.l.b16 %v113
  %v377 = vunpack.c.l.b16 %v114
  %v378 = vunpack.c.l.b16 %v115
  %v379 = vunpack.c.l.b16 %v116
  %v380 = vunpack.c.l.b16 %v117
  %v381 = vunpack.c.l.b16 %v118
  %v382 = vunpack.c.l.b16 %v119
  %v383 = vunpack.c.l.b16 %v120
  %v384 = vunpack.c.l.b16 %v121
  %v385 = vunpack.c.l.b16 %v122
  %v386 = vunpack.c.l.b16 %v123
  %v387 = vunpack.c.l.b16 %v124
  %v388 = vunpack.c.l.b16 %v125
  %v389 = vunpack.c.l.b16 %v126
  %v390 = vunpack.c.l.b16 %v127
  %v391 = vunpack.c.l.b16 %v128
  %v392 = vunpack.c.l.b16 %v129
  %v393 = vunpack.c.l.b16 %v130
  %v394 = vunpack.c.l.b16 %v131
  %v395 = vunpack.c.l.b16 %v132
  %v396 = vunpack.c.l.b16 %v133
  %v397 = vunpack.c.l.b16 %v134
  %v398 = vunpack.c.l.b16 %v135
  %v399 = vunpack.c.l.b16 %v136
  %v400 = vunpack.c.l.b16 %v137
  %v401 = vunpack.c.l.b16 %v138
  %v402 = vunpack.c.l.b16 %v139
  %v403 = vunpack.c.l.b16 %v140
  %v404 = vunpack.c.l.b16 %v141
  %v405 = vunpack.c.l.b16 %v142
  %v406 = vunpack.c.l.b16 %v143
  %v407 = vunpack.c.l.b16 %v144
  %v408 = vunpack.c.l.b16 %v145
  %v409 = vunpack.c.l.b16 %v146
  %v410 = vunpack.c.l.b16 %v147
  %v411 = vunpack.c.l.b16 %v148
  %v412 = vunpack.c.l.b16 %v149
  %v413 = vunpack.c.l.b16 %v150
  %v414 = vunpack.c.l.b16 %v151
  %v415 = vunpack.c.l.b16 %v152
  %v416 = vunpack.c.l.b16 %v153
  %v417 = vunpack.c.l.b16 %v154
  %v418 = vunpack.c.l.b16 %v155
  %v419 = vunpack.c.l.b16 %v156
  %v420 = vunpack.c.l.b16 %v157
  %v421 = vunpack.c.l.b16 %v158
  %v422 = vunpack.c.l.b16 %v159
  %v423 = vunpack.c.l.b16 %v160
  %v424 = vunpack.c.l.b16 %v161
  %v425 = vunpack.c.l.b16 %v162
  %v426 = vunpack.c.l.b16 %v163
  %v427 = vunpack.c.l.b16 %v164
  %v428 = vunpack.c.l.b16 %v165
  %v429 = vunpack.c.l.b16 %v166
  %v430 = vunpack.c.l.b16 %v167
  %v431 = vunpack.c.l.b16 %v168
  %v432 = vunpack.c.l.b16 %v169
  %v433 = vunpack.c.l.b16 %v170
  %v434 = vunpack.c.l.b16 %v171
  %v435 = vunpack.c.l.b16 %v172
  %v436 = vunpack.c.l.b16 %v173
  %v437 = vunpack.c.l.b16 %v174
  %v438 = vunpack.c.l.b16 %v175
  %v439 = vunpack.c.l.b16 %v176
  %v440 = vunpack.c.l.b16 %v177
  %v441 = vunpack.c.l.b16 %v178
  %v442 = vunpack.c.l.b16 %v179
  %v443 = vunpack.c.l.b16 %v180
  %v444 = vunpack.c.l.b16 %v181
  %v445 = vunpack.c.l.b16 %v182
  %v446 = vunpack.c.l.b16 %v183
  %v447 = vunpack.c.l.b16 %v184
  %v448 = vunpack.c.l.b16 %v185
  %v449 = vunpack.c.l.b16 %v186
  %v450 = vunpack.c.l.b16 %v187
  %v451 = vunpack.c.l.b16 %v188
  %v452 = vunpack.c.l.b16 %v189
  %v453 = vunpack.c.l.b16 %v190
  %v454 = vunpack.c.l.b16 %v191
  %v455 = vunpack.c.l.b16 %v192
  %v456 = vunpack.c.l.b16 %v193
  %v457 = vunpack.c.l.b16 %v194
  %v458 = vunpack.c.l.b16 %v195
  %v459 = vunpack.c.l.b16 %v196
  %v460 = vunpack.c.l.b16 %v197
  %v461 = vunpack.c.l.b16 %v198
  %v462 = vunpack.c.l.b16 %v199
  %v463 = vunpack.c.l.b16 %v200
  %v464 = vunpack.c.l.b16 %v201
  %v465 = vunpack.c.l.b16 %v202
  %v466 = vpack.c.b16 %v339, %v338
  %v467 = vpack.c.b16 %v341, %v340
  %v468 = vpack.c.b16 %v343, %v342
  %v469 = vpack.c.b16 %v345, %v344
  %v470 = vpack.c.b16 %v347, %v346
  %v471 = vpack.c.b16 %v349, %v348
  %v472 = vpack.c.b16 %v351, %v350
  %v473 = vpack.c.b16 %v353, %v352
  %v474 = vpack.c.b16 %v355, %v354
  %v475 = vpack.c.b16 %v357, %v356
  %v476 = vpack.c.b16 %v359, %v358
  %v477 = vpack.c.b16 %v361, %v360
  %v478 = vpack.c.b16 %v363, %v362
  %v479 = vpack.c.b16 %v365, %v364
  %v480 = vpack.c.b16 %v367, %v366
  %v481 = vpack.c.b16 %v369, %v368
  %v482 = vpack.c.b16 %v371, %v370
  %v483 = vpack.c.b16 %v373, %v372
  %v484 = vpack.c.b16 %v375, %v374
  %v485 = vpack.c.b16 %v377, %v376
  %v486 = vpack.c.b16 %v379, %v378
  %v487 = vpack.c.b16 %v381, %v380
  %v488 = vpack.c.b16 %v383, %v382
  %v489 = vpack.c.b16 %v385, %v384
  %v490 = vpack.c.b16 %v387, %v386
  %v491 = vpack.c.b16 %v389, %v388
  %v492 = vpack.c.b16 %v391, %v390
  %v493 = vpack.c.b16 %v393, %v392
  %v494 = vpack.c.b16 %v395, %v394
  %v495 = vpack.c.b16 %v397, %v396
  %v496 = vpack.c.b16 %v399, %v398
  %v497 = vpack.c.b16 %v401, %v400
  %v498 = vpack.c.b16 %v403, %v402
  %v499 = vpack.c.b16 %v405, %v404
  %v500 = vpack.c.b16 %v407, %v406
  %v501 = vpack.c.b16 %v409, %v408
  %v502 = vpack.c.b16 %v411, %v410
  %v503 = vpack.c.b16 %v413, %v412
  %v504 = vpack.c.b16 %v415, %v414
  %v505 = vpack.c.b16 %v417, %v416
  %v506 = vpack.c.b16 %v419, %v418
  %v507 = vpack.c.b16 %v421, %v420
  %v508 = vpack.c.b16 %v423, %v422
  %v509 = vpack.c.b16 %v425, %v424
  %v510 = vpack.c.b16 %v427, %v426
  %v511 = vpack.c.b16 %v429, %v428
  %v512 = vpack.c.b16 %v431, %v430
  %v513 = vpack.c.b16 %v433, %v432
  %v514 = vpack.c.b16 %v435, %v434
  %v515 = vpack.c.b16 %v437, %v436
  %v516 = vpack.c.b16 %v439, %v438
  %v517 = vpack.c.b16 %v441, %v440
  %v518 = vpack.c.b16 %v443, %v442
  %v519 = vpack.c.b16 %v445, %v444
  %v520 = vpack.c.b16 %v447, %v446
  %v521 = vpack.c.b16 %v449, %v448
  %v522 = vpack.c.b16 %v451, %v450
  %v523 = vpack.c.b16 %v453, %v452
  %v524 = vpack.c.b16 %v455, %v454
  %v525 = vpack.c.b16 %v457, %v456
  %v526 = vpack.c.b16 %v459, %v458
  %v527 = vpack.c.b16 %v461, %v460
  %v528 = vpack.c.b16 %v463, %v462
  %v529 = vpack.c.b16 %v465, %v464
  %594 = vmatprep.subr.bf16.mxu0 0
  %595 = vmatpush1.bf16.msra.mxu0 %v466
  %596 = vmatprep.subr.bf16.mxu0 0
  %597 = vmatpush1.bf16.msra.mxu0 %v467
  %598 = vmatprep.subr.bf16.mxu0 0
  %599 = vmatpush1.bf16.msra.mxu0 %v468
  %600 = vmatprep.subr.bf16.mxu0 0
  %601 = vmatpush1.bf16.msra.mxu0 %v469
  %602 = vmatprep.subr.bf16.mxu0 0
  %603 = vmatpush1.bf16.msra.mxu0 %v470
  %604 = vmatprep.subr.bf16.mxu0 0
  %605 = vmatpush1.bf16.msra.mxu0 %v471
  %606 = vmatprep.subr.bf16.mxu0 0
  %607 = vmatpush1.bf16.msra.mxu0 %v472
  %608 = vmatprep.subr.bf16.mxu0 0
  %609 = vmatpush1.bf16.msra.mxu0 %v473
  %610 = vmatprep.subr.bf16.mxu0 0
  %611 = vmatpush1.bf16.msra.mxu0 %v474
  %612 = vmatprep.subr.bf16.mxu0 0
  %613 = vmatpush1.bf16.msra.mxu0 %v475
  %614 = vmatprep.subr.bf16.mxu0 0
  %615 = vmatpush1.bf16.msra.mxu0 %v476
  %616 = vmatprep.subr.bf16.mxu0 0
  %617 = vmatpush1.bf16.msra.mxu0 %v477
  %618 = vmatprep.subr.bf16.mxu0 0
  %619 = vmatpush1.bf16.msra.mxu0 %v478
  %620 = vmatprep.subr.bf16.mxu0 0
  %621 = vmatpush1.bf16.msra.mxu0 %v479
  %622 = vmatprep.subr.bf16.mxu0 0
  %623 = vmatpush1.bf16.msra.mxu0 %v480
  %624 = vmatprep.subr.bf16.mxu0 0
  %625 = vmatpush1.bf16.msra.mxu0 %v481
  %626 = vmatprep.mubr.bf16.mxu0 %v68
  %627 = vmatmul.mubr.bf16.gmra.mrb[0].mxu0 %v67
  %v628 = vpop.f32.mrb[0].mxu0
  %v629 = vadd.f32 %v208, %v628
  %v630 = vpop.f32.mrb[0].mxu0
  %v631 = vpop.f32.mrb[0].mxu0
  %v632 = vpop.f32.mrb[0].mxu0
  %633 = vdwg.mxu0
  %634 = vmatprep.subr.bf16.mxu0 0
  %635 = vmatpush1.bf16.msra.mxu0 %v482
  %636 = vmatprep.subr.bf16.mxu0 0
  %637 = vmatpush1.bf16.msra.mxu0 %v483
  %638 = vmatprep.subr.bf16.mxu0 0
  %639 = vmatpush1.bf16.msra.mxu0 %v484
  %640 = vmatprep.subr.bf16.mxu0 0
  %641 = vmatpush1.bf16.msra.mxu0 %v485
  %642 = vmatprep.subr.bf16.mxu0 0
  %643 = vmatpush1.bf16.msra.mxu0 %v486
  %644 = vmatprep.subr.bf16.mxu0 0
  %645 = vmatpush1.bf16.msra.mxu0 %v487
  %646 = vmatprep.subr.bf16.mxu0 0
  %647 = vmatpush1.bf16.msra.mxu0 %v488
  %648 = vmatprep.subr.bf16.mxu0 0
  %649 = vmatpush1.bf16.msra.mxu0 %v489
  %650 = vmatprep.subr.bf16.mxu0 0
  %651 = vmatpush1.bf16.msra.mxu0 %v490
  %652 = vmatprep.subr.bf16.mxu0 0
  %653 = vmatpush1.bf16.msra.mxu0 %v491
  %654 = vmatprep.subr.bf16.mxu0 0
  %655 = vmatpush1.bf16.msra.mxu0 %v492
  %656 = vmatprep.subr.bf16.mxu0 0
  %657 = vmatpush1.bf16.msra.mxu0 %v493
  %658 = vmatprep.subr.bf16.mxu0 0
  %659 = vmatpush1.bf16.msra.mxu0 %v494
  %660 = vmatprep.subr.bf16.mxu0 0
  %661 = vmatpush1.bf16.msra.mxu0 %v495
  %662 = vmatprep.subr.bf16.mxu0 0
  %663 = vmatpush1.bf16.msra.mxu0 %v496
  %664 = vmatprep.subr.bf16.mxu0 0
  %665 = vmatpush1.bf16.msra.mxu0 %v497
  %666 = vmatprep.mubr.bf16.mxu0 %v70
  %667 = vmatmul.mubr.bf16.gmra.mrb[0].mxu0 %v69
  %v668 = vpop.f32.mrb[0].mxu0
  %v669 = vadd.f32 %v629, %v668
  %v670 = vpop.f32.mrb[0].mxu0
  %v671 = vpop.f32.mrb[0].mxu0
  %v672 = vpop.f32.mrb[0].mxu0
  %673 = vdwg.mxu0
  %674 = vmatprep.subr.bf16.mxu0 0
  %675 = vmatpush1.bf16.msra.mxu0 %v498
  %676 = vmatprep.subr.bf16.mxu0 0
  %677 = vmatpush1.bf16.msra.mxu0 %v499
  %678 = vmatprep.subr.bf16.mxu0 0
  %679 = vmatpush1.bf16.msra.mxu0 %v500
  %680 = vmatprep.subr.bf16.mxu0 0
  %681 = vmatpush1.bf16.msra.mxu0 %v501
  %682 = vmatprep.subr.bf16.mxu0 0
  %683 = vmatpush1.bf16.msra.mxu0 %v502
  %684 = vmatprep.subr.bf16.mxu0 0
  %685 = vmatpush1.bf16.msra.mxu0 %v503
  %686 = vmatprep.subr.bf16.mxu0 0
  %687 = vmatpush1.bf16.msra.mxu0 %v504
  %688 = vmatprep.subr.bf16.mxu0 0
  %689 = vmatpush1.bf16.msra.mxu0 %v505
  %690 = vmatprep.subr.bf16.mxu0 0
  %691 = vmatpush1.bf16.msra.mxu0 %v506
  %692 = vmatprep.subr.bf16.mxu0 0
  %693 = vmatpush1.bf16.msra.mxu0 %v507
  %694 = vmatprep.subr.bf16.mxu0 0
  %695 = vmatpush1.bf16.msra.mxu0 %v508
  %696 = vmatprep.subr.bf16.mxu0 0
  %697 = vmatpush1.bf16.msra.mxu0 %v509
  %698 = vmatprep.subr.bf16.mxu0 0
  %699 = vmatpush1.bf16.msra.mxu0 %v510
  %700 = vmatprep.subr.bf16.mxu0 0
  %701 = vmatpush1.bf16.msra.mxu0 %v511
  %702 = vmatprep.subr.bf16.mxu0 0
  %703 = vmatpush1.bf16.msra.mxu0 %v512
  %704 = vmatprep.subr.bf16.mxu0 0
  %705 = vmatpush1.bf16.msra.mxu0 %v513
  %706 = vmatprep.mubr.bf16.mxu0 %v72
  %707 = vmatmul.mubr.bf16.gmra.mrb[0].mxu0 %v71
  %v708 = vpop.f32.mrb[0].mxu0
  %v709 = vadd.f32 %v669, %v708
  %v710 = vpop.f32.mrb[0].mxu0
  %v711 = vpop.f32.mrb[0].mxu0
  %v712 = vpop.f32.mrb[0].mxu0
  %713 = vdwg.mxu0
  %714 = vmatprep.subr.bf16.mxu0 0
  %715 = vmatpush1.bf16.msra.mxu0 %v514
  %716 = vmatprep.subr.bf16.mxu0 0
  %717 = vmatpush1.bf16.msra.mxu0 %v515
  %718 = vmatprep.subr.bf16.mxu0 0
  %719 = vmatpush1.bf16.msra.mxu0 %v516
  %720 = vmatprep.subr.bf16.mxu0 0
  %721 = vmatpush1.bf16.msra.mxu0 %v517
  %722 = vmatprep.subr.bf16.mxu0 0
  %723 = vmatpush1.bf16.msra.mxu0 %v518
  %724 = vmatprep.subr.bf16.mxu0 0
  %725 = vmatpush1.bf16.msra.mxu0 %v519
  %726 = vmatprep.subr.bf16.mxu0 0
  %727 = vmatpush1.bf16.msra.mxu0 %v520
  %728 = vmatprep.subr.bf16.mxu0 0
  %729 = vmatpush1.bf16.msra.mxu0 %v521
  %730 = vmatprep.subr.bf16.mxu0 0
  %731 = vmatpush1.bf16.msra.mxu0 %v522
  %732 = vmatprep.subr.bf16.mxu0 0
  %733 = vmatpush1.bf16.msra.mxu0 %v523
  %734 = vmatprep.subr.bf16.mxu0 0
  %735 = vmatpush1.bf16.msra.mxu0 %v524
  %736 = vmatprep.subr.bf16.mxu0 0
  %737 = vmatpush1.bf16.msra.mxu0 %v525
  %738 = vmatprep.subr.bf16.mxu0 0
  %739 = vmatpush1.bf16.msra.mxu0 %v526
  %740 = vmatprep.subr.bf16.mxu0 0
  %741 = vmatpush1.bf16.msra.mxu0 %v527
  %742 = vmatprep.subr.bf16.mxu0 0
  %743 = vmatpush1.bf16.msra.mxu0 %v528
  %744 = vmatprep.subr.bf16.mxu0 0
  %745 = vmatpush1.bf16.msra.mxu0 %v529
  %746 = vmatprep.mubr.bf16.mxu0 %v74
  %747 = vmatmul.mubr.bf16.gmra.mrb[0].mxu0 %v73
  %v748 = vpop.f32.mrb[0].mxu0
  %v749 = vadd.f32 %v709, %v748
  %v750 = vpop.f32.mrb[0].mxu0
  %v751 = vpop.f32.mrb[0].mxu0
  %v752 = vpop.f32.mrb[0].mxu0
  %753 = vdwg.mxu0
  %v754 = vmax.f32 %v749, 0.0
  %v755 = vpack.c.bf16 %v754, %v754
  %v756 = vld [vmem:[%s3] sm:$0xff]
  %v757 = vld [vmem:[%s3 + $0x8] sm:$0xff]
  %v758 = vld [vmem:[%s3 + $0x10] sm:$0xff]
  %v759 = vld [vmem:[%s3 + $0x18] sm:$0xff]
  %v760 = vld [vmem:[%s3 + $0x20] sm:$0xff]
  %v761 = vld [vmem:[%s3 + $0x28] sm:$0xff]
  %v762 = vld [vmem:[%s3 + $0x30] sm:$0xff]
  %v763 = vld [vmem:[%s3 + $0x38] sm:$0xff]
  %v764 = vld [vmem:[%s3 + $0x40] sm:$0xff]
  %v765 = vld [vmem:[%s3 + $0x48] sm:$0xff]
  %v766 = vld [vmem:[%s3 + $0x50] sm:$0xff]
  %v767 = vld [vmem:[%s3 + $0x58] sm:$0xff]
  %v768 = vld [vmem:[%s3 + $0x60] sm:$0xff]
  %v769 = vld [vmem:[%s3 + $0x68] sm:$0xf]
  %v770 = vld [vmem:[%s3 + $0x6c] sm:$0xff]
  %v771 = vld [vmem:[%s3 + $0x74] sm:$0xff]
  %v772 = vld [vmem:[%s3 + $0x7c] sm:$0xff]
  %v773 = vld [vmem:[%s3 + $0x84] sm:$0xff]
  %v774 = vld [vmem:[%s3 + $0x8c] sm:$0xff]
  %v775 = vld [vmem:[%s3 + $0x94] sm:$0xff]
  %v776 = vld [vmem:[%s3 + $0x9c] sm:$0xff]
  %v777 = vld [vmem:[%s3 + $0xa4] sm:$0xff]
  %v778 = vld [vmem:[%s3 + $0xac] sm:$0xff]
  %v779 = vld [vmem:[%s3 + $0xb4] sm:$0xff]
  %v780 = vld [vmem:[%s3 + $0xbc] sm:$0xff]
  %v781 = vld [vmem:[%s3 + $0xc4] sm:$0xff]
  %v782 = vld [vmem:[%s3 + $0xcc] sm:$0xff]
  %v783 = vld [vmem:[%s3 + $0xd4] sm:$0xf]
  %v784 = vld [vmem:[%s3 + $0xd8] sm:$0xff]
  %v785 = vld [vmem:[%s3 + $0xe0] sm:$0xff]
  %v786 = vld [vmem:[%s3 + $0xe8] sm:$0xff]
  %v787 = vld [vmem:[%s3 + $0xf0] sm:$0xff]
  %v788 = vld [vmem:[%s3 + $0xf8] sm:$0xff]
  %v789 = vld [vmem:[%s3 + $0x100] sm:$0xff]
  %v790 = vld [vmem:[%s3 + $0x108] sm:$0xff]
  %v791 = vld [vmem:[%s3 + $0x110] sm:$0xff]
  %v792 = vld [vmem:[%s3 + $0x118] sm:$0xff]
  %v793 = vld [vmem:[%s3 + $0x120] sm:$0xff]
  %v794 = vld [vmem:[%s3 + $0x128] sm:$0xff]
  %v795 = vld [vmem:[%s3 + $0x130] sm:$0xff]
  %v796 = vld [vmem:[%s3 + $0x138] sm:$0xff]
  %v797 = vld [vmem:[%s3 + $0x140] sm:$0xf]
  %v798 = vld [vmem:[%s3 + $0x144] sm:$0xff]
  %v799 = vld [vmem:[%s3 + $0x14c] sm:$0xff]
  %v800 = vld [vmem:[%s3 + $0x154] sm:$0xff]
  %v801 = vld [vmem:[%s3 + $0x15c] sm:$0xff]
  %v802 = vld [vmem:[%s3 + $0x164] sm:$0xff]
  %v803 = vld [vmem:[%s3 + $0x16c] sm:$0xff]
  %v804 = vld [vmem:[%s3 + $0x174] sm:$0xff]
  %v805 = vld [vmem:[%s3 + $0x17c] sm:$0xff]
  %v806 = vld [vmem:[%s3 + $0x184] sm:$0xff]
  %v807 = vld [vmem:[%s3 + $0x18c] sm:$0xff]
  %v808 = vld [vmem:[%s3 + $0x194] sm:$0xff]
  %v809 = vld [vmem:[%s3 + $0x19c] sm:$0xff]
  %v810 = vld [vmem:[%s3 + $0x1a4] sm:$0xff]
  %v811 = vld [vmem:[%s3 + $0x1ac] sm:$0xf]
  %v812 = vld [vmem:[%s4] sm:$0xff]
  %v813 = vld [vmem:[%s4 + $0x8] sm:$0xff]
  %v814 = vld [vmem:[%s4 + $0x10] sm:$0xff]
  %v815 = vld [vmem:[%s4 + $0x18] sm:$0x7]
  %v820 = vlaneseq
  %v821 = vshrl.u32 %v820, 7
  %v822 = vsub.s32 0, %v821
  %v823 = vrot.slane %v812, %v822
  %v824 = vlaneseq
  %v825 = vshrl.u32 %v824, 7
  %v826 = vsub.s32 1, %v825
  %v827 = vrot.slane %v812, %v826
  %v828 = vlaneseq
  %v829 = vshrl.u32 %v828, 7
  %v830 = vsub.s32 2, %v829
  %v831 = vrot.slane %v812, %v830
  %v832 = vlaneseq
  %v833 = vshrl.u32 %v832, 7
  %v834 = vsub.s32 3, %v833
  %v835 = vrot.slane %v812, %v834
  %v836 = vlaneseq
  %v837 = vshrl.u32 %v836, 7
  %v838 = vsub.s32 4, %v837
  %v839 = vrot.slane %v812, %v838
  %v840 = vlaneseq
  %v841 = vshrl.u32 %v840, 7
  %v842 = vsub.s32 5, %v841
  %v843 = vrot.slane %v812, %v842
  %v844 = vlaneseq
  %v845 = vshrl.u32 %v844, 7
  %v846 = vsub.s32 6, %v845
  %v847 = vrot.slane %v812, %v846
  %v848 = vlaneseq
  %v849 = vshrl.u32 %v848, 7
  %v850 = vsub.s32 7, %v849
  %v851 = vrot.slane %v812, %v850
  %v852 = vlaneseq
  %v853 = vshrl.u32 %v852, 7
  %v854 = vsub.s32 0, %v853
  %v855 = vrot.slane %v813, %v854
  %v856 = vlaneseq
  %v857 = vshrl.u32 %v856, 7
  %v858 = vsub.s32 1, %v857
  %v859 = vrot.slane %v813, %v858
  %v860 = vlaneseq
  %v861 = vshrl.u32 %v860, 7
  %v862 = vsub.s32 2, %v861
  %v863 = vrot.slane %v813, %v862
  %v864 = vlaneseq
  %v865 = vshrl.u32 %v864, 7
  %v866 = vsub.s32 3, %v865
  %v867 = vrot.slane %v813, %v866
  %v868 = vlaneseq
  %v869 = vshrl.u32 %v868, 7
  %v870 = vsub.s32 4, %v869
  %v871 = vrot.slane %v813, %v870
  %v872 = vlaneseq
  %v873 = vshrl.u32 %v872, 7
  %v874 = vsub.s32 5, %v873
  %v875 = vrot.slane %v813, %v874
  %v876 = vlaneseq
  %v877 = vshrl.u32 %v876, 7
  %v878 = vsub.s32 6, %v877
  %v879 = vrot.slane %v813, %v878
  %v880 = vlaneseq
  %v881 = vshrl.u32 %v880, 7
  %v882 = vsub.s32 7, %v881
  %v883 = vrot.slane %v813, %v882
  %v884 = vlaneseq
  %v885 = vshrl.u32 %v884, 7
  %v886 = vsub.s32 0, %v885
  %v887 = vrot.slane %v814, %v886
  %v888 = vlaneseq
  %v889 = vshrl.u32 %v888, 7
  %v890 = vsub.s32 1, %v889
  %v891 = vrot.slane %v814, %v890
  %v892 = vlaneseq
  %v893 = vshrl.u32 %v892, 7
  %v894 = vsub.s32 2, %v893
  %v895 = vrot.slane %v814, %v894
  %v896 = vlaneseq
  %v897 = vshrl.u32 %v896, 7
  %v898 = vsub.s32 3, %v897
  %v899 = vrot.slane %v814, %v898
  %v900 = vlaneseq
  %v901 = vshrl.u32 %v900, 7
  %v902 = vsub.s32 4, %v901
  %v903 = vrot.slane %v814, %v902
  %v904 = vlaneseq
  %v905 = vshrl.u32 %v904, 7
  %v906 = vsub.s32 5, %v905
  %v907 = vrot.slane %v814, %v906
  %v908 = vlaneseq
  %v909 = vshrl.u32 %v908, 7
  %v910 = vsub.s32 6, %v909
  %v911 = vrot.slane %v814, %v910
  %v912 = vlaneseq
  %v913 = vshrl.u32 %v912, 7
  %v914 = vsub.s32 7, %v913
  %v915 = vrot.slane %v814, %v914
  %v916 = vlaneseq
  %v917 = vshrl.u32 %v916, 7
  %v918 = vsub.s32 0, %v917
  %v919 = vrot.slane %v815, %v918
  %v920 = vlaneseq
  %v921 = vshrl.u32 %v920, 7
  %v922 = vsub.s32 1, %v921
  %v923 = vrot.slane %v815, %v922
  %v924 = vlaneseq
  %v925 = vshrl.u32 %v924, 7
  %v926 = vsub.s32 2, %v925
  %v927 = vrot.slane %v815, %v926
  %v1011 = vunpack.c.l.b16 %v756
  %v1012 = vunpack.c.h.b16 %v756
  %v1013 = vunpack.c.l.b16 %v757
  %v1014 = vunpack.c.h.b16 %v757
  %v1015 = vunpack.c.l.b16 %v758
  %v1016 = vunpack.c.h.b16 %v758
  %v1017 = vunpack.c.l.b16 %v759
  %v1018 = vunpack.c.h.b16 %v759
  %v1019 = vunpack.c.l.b16 %v760
  %v1020 = vunpack.c.h.b16 %v760
  %v1021 = vunpack.c.l.b16 %v761
  %v1022 = vunpack.c.h.b16 %v761
  %v1023 = vunpack.c.l.b16 %v762
  %v1024 = vunpack.c.h.b16 %v762
  %v1025 = vunpack.c.l.b16 %v763
  %v1026 = vunpack.c.h.b16 %v763
  %v1027 = vunpack.c.l.b16 %v764
  %v1028 = vunpack.c.h.b16 %v764
  %v1029 = vunpack.c.l.b16 %v765
  %v1030 = vunpack.c.h.b16 %v765
  %v1031 = vunpack.c.l.b16 %v766
  %v1032 = vunpack.c.h.b16 %v766
  %v1033 = vunpack.c.l.b16 %v767
  %v1034 = vunpack.c.h.b16 %v767
  %v1035 = vunpack.c.l.b16 %v768
  %v1036 = vunpack.c.h.b16 %v768
  %v1037 = vunpack.c.l.b16 %v769
  %v1038 = vunpack.c.l.b16 %v770
  %v1039 = vunpack.c.h.b16 %v770
  %v1040 = vunpack.c.l.b16 %v771
  %v1041 = vunpack.c.h.b16 %v771
  %v1042 = vunpack.c.l.b16 %v772
  %v1043 = vunpack.c.h.b16 %v772
  %v1044 = vunpack.c.l.b16 %v773
  %v1045 = vunpack.c.h.b16 %v773
  %v1046 = vunpack.c.l.b16 %v774
  %v1047 = vunpack.c.h.b16 %v774
  %v1048 = vunpack.c.l.b16 %v775
  %v1049 = vunpack.c.h.b16 %v775
  %v1050 = vunpack.c.l.b16 %v776
  %v1051 = vunpack.c.h.b16 %v776
  %v1052 = vunpack.c.l.b16 %v777
  %v1053 = vunpack.c.h.b16 %v777
  %v1054 = vunpack.c.l.b16 %v778
  %v1055 = vunpack.c.h.b16 %v778
  %v1056 = vunpack.c.l.b16 %v779
  %v1057 = vunpack.c.h.b16 %v779
  %v1058 = vunpack.c.l.b16 %v780
  %v1059 = vunpack.c.h.b16 %v780
  %v1060 = vunpack.c.l.b16 %v781
  %v1061 = vunpack.c.h.b16 %v781
  %v1062 = vunpack.c.l.b16 %v782
  %v1063 = vunpack.c.h.b16 %v782
  %v1064 = vunpack.c.l.b16 %v783
  %v1065 = vunpack.c.l.b16 %v784
  %v1066 = vunpack.c.h.b16 %v784
  %v1067 = vunpack.c.l.b16 %v785
  %v1068 = vunpack.c.h.b16 %v785
  %v1069 = vunpack.c.l.b16 %v786
  %v1070 = vunpack.c.h.b16 %v786
  %v1071 = vunpack.c.l.b16 %v787
  %v1072 = vunpack.c.h.b16 %v787
  %v1073 = vunpack.c.l.b16 %v788
  %v1074 = vunpack.c.h.b16 %v788
  %v1075 = vunpack.c.l.b16 %v789
  %v1076 = vunpack.c.h.b16 %v789
  %v1077 = vunpack.c.l.b16 %v790
  %v1078 = vunpack.c.h.b16 %v790
  %v1079 = vunpack.c.l.b16 %v791
  %v1080 = vunpack.c.h.b16 %v791
  %v1081 = vunpack.c.l.b16 %v792
  %v1082 = vunpack.c.h.b16 %v792
  %v1083 = vunpack.c.l.b16 %v793
  %v1084 = vunpack.c.h.b16 %v793
  %v1085 = vunpack.c.l.b16 %v794
  %v1086 = vunpack.c.h.b16 %v794
  %v1087 = vunpack.c.l.b16 %v795
  %v1088 = vunpack.c.h.b16 %v795
  %v1089 = vunpack.c.l.b16 %v796
  %v1090 = vunpack.c.h.b16 %v796
  %v1091 = vunpack.c.l.b16 %v797
  %v1092 = vunpack.c.l.b16 %v798
  %v1093 = vunpack.c.h.b16 %v798
  %v1094 = vunpack.c.l.b16 %v799
  %v1095 = vunpack.c.h.b16 %v799
  %v1096 = vunpack.c.l.b16 %v800
  %v1097 = vunpack.c.h.b16 %v800
  %v1098 = vunpack.c.l.b16 %v801
  %v1099 = vunpack.c.h.b16 %v801
  %v1100 = vunpack.c.l.b16 %v802
  %v1101 = vunpack.c.h.b16 %v802
  %v1102 = vunpack.c.l.b16 %v803
  %v1103 = vunpack.c.h.b16 %v803
  %v1104 = vunpack.c.l.b16 %v804
  %v1105 = vunpack.c.h.b16 %v804
  %v1106 = vunpack.c.l.b16 %v805
  %v1107 = vunpack.c.h.b16 %v805
  %v1108 = vunpack.c.l.b16 %v806
  %v1109 = vunpack.c.h.b16 %v806
  %v1110 = vunpack.c.l.b16 %v807
  %v1111 = vunpack.c.h.b16 %v807
  %v1112 = vunpack.c.l.b16 %v808
  %v1113 = vunpack.c.h.b16 %v808
  %v1114 = vunpack.c.l.b16 %v809
  %v1115 = vunpack.c.h.b16 %v809
  %v1116 = vunpack.c.l.b16 %v810
  %v1117 = vunpack.c.h.b16 %v810
  %v1118 = vunpack.c.l.b16 %v811
  %v1119 = vpack.c.b16 %v1038, %v1011
  %v1120 = vpack.c.b16 %v1039, %v1012
  %v1121 = vpack.c.b16 %v1040, %v1013
  %v1122 = vpack.c.b16 %v1041, %v1014
  %v1123 = vpack.c.b16 %v1042, %v1015
  %v1124 = vpack.c.b16 %v1043, %v1016
  %v1125 = vpack.c.b16 %v1044, %v1017
  %v1126 = vpack.c.b16 %v1045, %v1018
  %v1127 = vpack.c.b16 %v1046, %v1019
  %v1128 = vpack.c.b16 %v1047, %v1020
  %v1129 = vpack.c.b16 %v1048, %v1021
  %v1130 = vpack.c.b16 %v1049, %v1022
  %v1131 = vpack.c.b16 %v1050, %v1023
  %v1132 = vpack.c.b16 %v1051, %v1024
  %v1133 = vpack.c.b16 %v1052, %v1025
  %v1134 = vpack.c.b16 %v1053, %v1026
  %v1135 = vpack.c.b16 %v1054, %v1027
  %v1136 = vpack.c.b16 %v1055, %v1028
  %v1137 = vpack.c.b16 %v1056, %v1029
  %v1138 = vpack.c.b16 %v1057, %v1030
  %v1139 = vpack.c.b16 %v1058, %v1031
  %v1140 = vpack.c.b16 %v1059, %v1032
  %v1141 = vpack.c.b16 %v1060, %v1033
  %v1142 = vpack.c.b16 %v1061, %v1034
  %v1143 = vpack.c.b16 %v1062, %v1035
  %v1144 = vpack.c.b16 %v1063, %v1036
  %v1145 = vpack.c.b16 %v1064, %v1037
  %v1146 = vpack.c.b16 %v1092, %v1065
  %v1147 = vpack.c.b16 %v1093, %v1066
  %v1148 = vpack.c.b16 %v1094, %v1067
  %v1149 = vpack.c.b16 %v1095, %v1068
  %v1150 = vpack.c.b16 %v1096, %v1069
  %v1151 = vpack.c.b16 %v1097, %v1070
  %v1152 = vpack.c.b16 %v1098, %v1071
  %v1153 = vpack.c.b16 %v1099, %v1072
  %v1154 = vpack.c.b16 %v1100, %v1073
  %v1155 = vpack.c.b16 %v1101, %v1074
  %v1156 = vpack.c.b16 %v1102, %v1075
  %v1157 = vpack.c.b16 %v1103, %v1076
  %v1158 = vpack.c.b16 %v1104, %v1077
  %v1159 = vpack.c.b16 %v1105, %v1078
  %v1160 = vpack.c.b16 %v1106, %v1079
  %v1161 = vpack.c.b16 %v1107, %v1080
  %v1162 = vpack.c.b16 %v1108, %v1081
  %v1163 = vpack.c.b16 %v1109, %v1082
  %v1164 = vpack.c.b16 %v1110, %v1083
  %v1165 = vpack.c.b16 %v1111, %v1084
  %v1166 = vpack.c.b16 %v1112, %v1085
  %v1167 = vpack.c.b16 %v1113, %v1086
  %v1168 = vpack.c.b16 %v1114, %v1087
  %v1169 = vpack.c.b16 %v1115, %v1088
  %v1170 = vpack.c.b16 %v1116, %v1089
  %v1171 = vpack.c.b16 %v1117, %v1090
  %v1172 = vpack.c.b16 %v1118, %v1091
  %vm1227 = vcmask 261120
  %v1229 = vsel %vm1227, %v755, 0
  %1231 = vmatprep.subr.bf16.mxu0 %v1120
  %1232 = vmatpush1.bf16.msra.mxu0 %v1119
  %1233 = vmatprep.subr.bf16.mxu0 %v1147
  %1234 = vmatpush1.bf16.msra.mxu0 %v1146
  %1235 = vmatprep.subr.bf16.mxu0 0
  %1236 = vmatpush1.bf16.msra.mxu0 0
  %1237 = vmatprep.subr.bf16.mxu0 0
  %1238 = vmatpush1.bf16.msra.mxu0 0
  %1239 = vmatprep.subr.bf16.mxu0 0
  %1240 = vmatpush1.bf16.msra.mxu0 0
  %1241 = vmatprep.subr.bf16.mxu0 0
  %1242 = vmatpush1.bf16.msra.mxu0 0
  %1243 = vmatprep.subr.bf16.mxu0 0
  %1244 = vmatpush1.bf16.msra.mxu0 0
  %1245 = vmatprep.subr.bf16.mxu0 0
  %1246 = vmatpush1.bf16.msra.mxu0 0
  %1247 = vmatprep.subr.bf16.mxu0 0
  %1248 = vmatpush1.bf16.msra.mxu0 0
  %1249 = vmatprep.subr.bf16.mxu0 0
  %1250 = vmatpush1.bf16.msra.mxu0 0
  %1251 = vmatprep.subr.bf16.mxu0 0
  %1252 = vmatpush1.bf16.msra.mxu0 0
  %1253 = vmatprep.subr.bf16.mxu0 0
  %1254 = vmatpush1.bf16.msra.mxu0 0
  %1255 = vmatprep.subr.bf16.mxu0 0
  %1256 = vmatpush1.bf16.msra.mxu0 0
  %1257 = vmatprep.subr.bf16.mxu0 0
  %1258 = vmatpush1.bf16.msra.mxu0 0
  %1259 = vmatprep.subr.bf16.mxu0 0
  %1260 = vmatpush1.bf16.msra.mxu0 0
  %1261 = vmatprep.subr.bf16.mxu0 0
  %1262 = vmatpush1.bf16.msra.mxu0 0
  %1263 = vmatprep.mubr.bf16.mxu0 0
  %1264 = vmatmul.mubr.bf16.gmra.mrb[0].mxu0 %v1229
  %v1265 = vpop.f32.mrb[0].mxu0
  %v1266 = vadd.f32 %v823, %v1265
  %v1267 = vpop.f32.mrb[0].mxu0
  %v1268 = vadd.f32 %v827, %v1267
  %v1269 = vpop.f32.mrb[0].mxu0
  %v1270 = vpop.f32.mrb[0].mxu0
  %1271 = vdwg.mxu0
  %1272 = vmatprep.subr.bf16.mxu0 %v1122
  %1273 = vmatpush1.bf16.msra.mxu0 %v1121
  %1274 = vmatprep.subr.bf16.mxu0 %v1149
  %1275 = vmatpush1.bf16.msra.mxu0 %v1148
  %1276 = vmatprep.subr.bf16.mxu0 0
  %1277 = vmatpush1.bf16.msra.mxu0 0
  %1278 = vmatprep.subr.bf16.mxu0 0
  %1279 = vmatpush1.bf16.msra.mxu0 0
  %1280 = vmatprep.subr.bf16.mxu0 0
  %1281 = vmatpush1.bf16.msra.mxu0 0
  %1282 = vmatprep.subr.bf16.mxu0 0
  %1283 = vmatpush1.bf16.msra.mxu0 0
  %1284 = vmatprep.subr.bf16.mxu0 0
  %1285 = vmatpush1.bf16.msra.mxu0 0
  %1286 = vmatprep.subr.bf16.mxu0 0
  %1287 = vmatpush1.bf16.msra.mxu0 0
  %1288 = vmatprep.subr.bf16.mxu0 0
  %1289 = vmatpush1.bf16.msra.mxu0 0
  %1290 = vmatprep.subr.bf16.mxu0 0
  %1291 = vmatpush1.bf16.msra.mxu0 0
  %1292 = vmatprep.subr.bf16.mxu0 0
  %1293 = vmatpush1.bf16.msra.mxu0 0
  %1294 = vmatprep.subr.bf16.mxu0 0
  %1295 = vmatpush1.bf16.msra.mxu0 0
  %1296 = vmatprep.subr.bf16.mxu0 0
  %1297 = vmatpush1.bf16.msra.mxu0 0
  %1298 = vmatprep.subr.bf16.mxu0 0
  %1299 = vmatpush1.bf16.msra.mxu0 0
  %1300 = vmatprep.subr.bf16.mxu0 0
  %1301 = vmatpush1.bf16.msra.mxu0 0
  %1302 = vmatprep.subr.bf16.mxu0 0
  %1303 = vmatpush1.bf16.msra.mxu0 0
  %1304 = vmatprep.mubr.bf16.mxu0 0
  %1305 = vmatmul.mubr.bf16.gmra.mrb[0].mxu0 %v1229
  %v1306 = vpop.f32.mrb[0].mxu0
  %v1307 = vadd.f32 %v831, %v1306
  %v1308 = vpop.f32.mrb[0].mxu0
  %v1309 = vadd.f32 %v835, %v1308
  %v1310 = vpop.f32.mrb[0].mxu0
  %v1311 = vpop.f32.mrb[0].mxu0
  %1312 = vdwg.mxu0
  %1313 = vmatprep.subr.bf16.mxu0 %v1124
  %1314 = vmatpush1.bf16.msra.mxu0 %v1123
  %1315 = vmatprep.subr.bf16.mxu0 %v1151
  %1316 = vmatpush1.bf16.msra.mxu0 %v1150
  %1317 = vmatprep.subr.bf16.mxu0 0
  %1318 = vmatpush1.bf16.msra.mxu0 0
  %1319 = vmatprep.subr.bf16.mxu0 0
  %1320 = vmatpush1.bf16.msra.mxu0 0
  %1321 = vmatprep.subr.bf16.mxu0 0
  %1322 = vmatpush1.bf16.msra.mxu0 0
  %1323 = vmatprep.subr.bf16.mxu0 0
  %1324 = vmatpush1.bf16.msra.mxu0 0
  %1325 = vmatprep.subr.bf16.mxu0 0
  %1326 = vmatpush1.bf16.msra.mxu0 0
  %1327 = vmatprep.subr.bf16.mxu0 0
  %1328 = vmatpush1.bf16.msra.mxu0 0
  %1329 = vmatprep.subr.bf16.mxu0 0
  %1330 = vmatpush1.bf16.msra.mxu0 0
  %1331 = vmatprep.subr.bf16.mxu0 0
  %1332 = vmatpush1.bf16.msra.mxu0 0
  %1333 = vmatprep.subr.bf16.mxu0 0
  %1334 = vmatpush1.bf16.msra.mxu0 0
  %1335 = vmatprep.subr.bf16.mxu0 0
  %1336 = vmatpush1.bf16.msra.mxu0 0
  %1337 = vmatprep.subr.bf16.mxu0 0
  %1338 = vmatpush1.bf16.msra.mxu0 0
  %1339 = vmatprep.subr.bf16.mxu0 0
  %1340 = vmatpush1.bf16.msra.mxu0 0
  %1341 = vmatprep.subr.bf16.mxu0 0
  %1342 = vmatpush1.bf16.msra.mxu0 0
  %1343 = vmatprep.subr.bf16.mxu0 0
  %1344 = vmatpush1.bf16.msra.mxu0 0
  %1345 = vmatprep.mubr.bf16.mxu0 0
  %1346 = vmatmul.mubr.bf16.gmra.mrb[0].mxu0 %v1229
  %v1347 = vpop.f32.mrb[0].mxu0
  %v1348 = vadd.f32 %v839, %v1347
  %v1349 = vpop.f32.mrb[0].mxu0
  %v1350 = vadd.f32 %v843, %v1349
  %v1351 = vpop.f32.mrb[0].mxu0
  %v1352 = vpop.f32.mrb[0].mxu0
  %1353 = vdwg.mxu0
  %1354 = vmatprep.subr.bf16.mxu0 %v1126
  %1355 = vmatpush1.bf16.msra.mxu0 %v1125
  %1356 = vmatprep.subr.bf16.mxu0 %v1153
  %1357 = vmatpush1.bf16.msra.mxu0 %v1152
  %1358 = vmatprep.subr.bf16.mxu0 0
  %1359 = vmatpush1.bf16.msra.mxu0 0
  %1360 = vmatprep.subr.bf16.mxu0 0
  %1361 = vmatpush1.bf16.msra.mxu0 0
  %1362 = vmatprep.subr.bf16.mxu0 0
  %1363 = vmatpush1.bf16.msra.mxu0 0
  %1364 = vmatprep.subr.bf16.mxu0 0
  %1365 = vmatpush1.bf16.msra.mxu0 0
  %1366 = vmatprep.subr.bf16.mxu0 0
  %1367 = vmatpush1.bf16.msra.mxu0 0
  %1368 = vmatprep.subr.bf16.mxu0 0
  %1369 = vmatpush1.bf16.msra.mxu0 0
  %1370 = vmatprep.subr.bf16.mxu0 0
  %1371 = vmatpush1.bf16.msra.mxu0 0
  %1372 = vmatprep.subr.bf16.mxu0 0
  %1373 = vmatpush1.bf16.msra.mxu0 0
  %1374 = vmatprep.subr.bf16.mxu0 0
  %1375 = vmatpush1.bf16.msra.mxu0 0
  %1376 = vmatprep.subr.bf16.mxu0 0
  %1377 = vmatpush1.bf16.msra.mxu0 0
  %1378 = vmatprep.subr.bf16.mxu0 0
  %1379 = vmatpush1.bf16.msra.mxu0 0
  %1380 = vmatprep.subr.bf16.mxu0 0
  %1381 = vmatpush1.bf16.msra.mxu0 0
  %1382 = vmatprep.subr.bf16.mxu0 0
  %1383 = vmatpush1.bf16.msra.mxu0 0
  %1384 = vmatprep.subr.bf16.mxu0 0
  %1385 = vmatpush1.bf16.msra.mxu0 0
  %1386 = vmatprep.mubr.bf16.mxu0 0
  %1387 = vmatmul.mubr.bf16.gmra.mrb[0].mxu0 %v1229
  %v1388 = vpop.f32.mrb[0].mxu0
  %v1389 = vadd.f32 %v847, %v1388
  %v1390 = vpop.f32.mrb[0].mxu0
  %v1391 = vadd.f32 %v851, %v1390
  %v1392 = vpop.f32.mrb[0].mxu0
  %v1393 = vpop.f32.mrb[0].mxu0
  %1394 = vdwg.mxu0
  %1395 = vmatprep.subr.bf16.mxu0 %v1128
  %1396 = vmatpush1.bf16.msra.mxu0 %v1127
  %1397 = vmatprep.subr.bf16.mxu0 %v1155
  %1398 = vmatpush1.bf16.msra.mxu0 %v1154
  %1399 = vmatprep.subr.bf16.mxu0 0
  %1400 = vmatpush1.bf16.msra.mxu0 0
  %1401 = vmatprep.subr.bf16.mxu0 0
  %1402 = vmatpush1.bf16.msra.mxu0 0
  %1403 = vmatprep.subr.bf16.mxu0 0
  %1404 = vmatpush1.bf16.msra.mxu0 0
  %1405 = vmatprep.subr.bf16.mxu0 0
  %1406 = vmatpush1.bf16.msra.mxu0 0
  %1407 = vmatprep.subr.bf16.mxu0 0
  %1408 = vmatpush1.bf16.msra.mxu0 0
  %1409 = vmatprep.subr.bf16.mxu0 0
  %1410 = vmatpush1.bf16.msra.mxu0 0
  %1411 = vmatprep.subr.bf16.mxu0 0
  %1412 = vmatpush1.bf16.msra.mxu0 0
  %1413 = vmatprep.subr.bf16.mxu0 0
  %1414 = vmatpush1.bf16.msra.mxu0 0
  %1415 = vmatprep.subr.bf16.mxu0 0
  %1416 = vmatpush1.bf16.msra.mxu0 0
  %1417 = vmatprep.subr.bf16.mxu0 0
  %1418 = vmatpush1.bf16.msra.mxu0 0
  %1419 = vmatprep.subr.bf16.mxu0 0
  %1420 = vmatpush1.bf16.msra.mxu0 0
  %1421 = vmatprep.subr.bf16.mxu0 0
  %1422 = vmatpush1.bf16.msra.mxu0 0
  %1423 = vmatprep.subr.bf16.mxu0 0
  %1424 = vmatpush1.bf16.msra.mxu0 0
  %1425 = vmatprep.subr.bf16.mxu0 0
  %1426 = vmatpush1.bf16.msra.mxu0 0
  %1427 = vmatprep.mubr.bf16.mxu0 0
  %1428 = vmatmul.mubr.bf16.gmra.mrb[0].mxu0 %v1229
  %v1429 = vpop.f32.mrb[0].mxu0
  %v1430 = vadd.f32 %v855, %v1429
  %v1431 = vpop.f32.mrb[0].mxu0
  %v1432 = vadd.f32 %v859, %v1431
  %v1433 = vpop.f32.mrb[0].mxu0
  %v1434 = vpop.f32.mrb[0].mxu0
  %1435 = vdwg.mxu0
  %1436 = vmatprep.subr.bf16.mxu0 %v1130
  %1437 = vmatpush1.bf16.msra.mxu0 %v1129
  %1438 = vmatprep.subr.bf16.mxu0 %v1157
  %1439 = vmatpush1.bf16.msra.mxu0 %v1156
  %1440 = vmatprep.subr.bf16.mxu0 0
  %1441 = vmatpush1.bf16.msra.mxu0 0
  %1442 = vmatprep.subr.bf16.mxu0 0
  %1443 = vmatpush1.bf16.msra.mxu0 0
  %1444 = vmatprep.subr.bf16.mxu0 0
  %1445 = vmatpush1.bf16.msra.mxu0 0
  %1446 = vmatprep.subr.bf16.mxu0 0
  %1447 = vmatpush1.bf16.msra.mxu0 0
  %1448 = vmatprep.subr.bf16.mxu0 0
  %1449 = vmatpush1.bf16.msra.mxu0 0
  %1450 = vmatprep.subr.bf16.mxu0 0
  %1451 = vmatpush1.bf16.msra.mxu0 0
  %1452 = vmatprep.subr.bf16.mxu0 0
  %1453 = vmatpush1.bf16.msra.mxu0 0
  %1454 = vmatprep.subr.bf16.mxu0 0
  %1455 = vmatpush1.bf16.msra.mxu0 0
  %1456 = vmatprep.subr.bf16.mxu0 0
  %1457 = vmatpush1.bf16.msra.mxu0 0
  %1458 = vmatprep.subr.bf16.mxu0 0
  %1459 = vmatpush1.bf16.msra.mxu0 0
  %1460 = vmatprep.subr.bf16.mxu0 0
  %1461 = vmatpush1.bf16.msra.mxu0 0
  %1462 = vmatprep.subr.bf16.mxu0 0
  %1463 = vmatpush1.bf16.msra.mxu0 0
  %1464 = vmatprep.subr.bf16.mxu0 0
  %1465 = vmatpush1.bf16.msra.mxu0 0
  %1466 = vmatprep.subr.bf16.mxu0 0
  %1467 = vmatpush1.bf16.msra.mxu0 0
  %1468 = vmatprep.mubr.bf16.mxu0 0
  %1469 = vmatmul.mubr.bf16.gmra.mrb[0].mxu0 %v1229
  %v1470 = vpop.f32.mrb[0].mxu0
  %v1471 = vadd.f32 %v863, %v1470
  %v1472 = vpop.f32.mrb[0].mxu0
  %v1473 = vadd.f32 %v867, %v1472
  %v1474 = vpop.f32.mrb[0].mxu0
  %v1475 = vpop.f32.mrb[0].mxu0
  %1476 = vdwg.mxu0
  %1477 = vmatprep.subr.bf16.mxu0 %v1132
  %1478 = vmatpush1.bf16.msra.mxu0 %v1131
  %1479 = vmatprep.subr.bf16.mxu0 %v1159
  %1480 = vmatpush1.bf16.msra.mxu0 %v1158
  %1481 = vmatprep.subr.bf16.mxu0 0
  %1482 = vmatpush1.bf16.msra.mxu0 0
  %1483 = vmatprep.subr.bf16.mxu0 0
  %1484 = vmatpush1.bf16.msra.mxu0 0
  %1485 = vmatprep.subr.bf16.mxu0 0
  %1486 = vmatpush1.bf16.msra.mxu0 0
  %1487 = vmatprep.subr.bf16.mxu0 0
  %1488 = vmatpush1.bf16.msra.mxu0 0
  %1489 = vmatprep.subr.bf16.mxu0 0
  %1490 = vmatpush1.bf16.msra.mxu0 0
  %1491 = vmatprep.subr.bf16.mxu0 0
  %1492 = vmatpush1.bf16.msra.mxu0 0
  %1493 = vmatprep.subr.bf16.mxu0 0
  %1494 = vmatpush1.bf16.msra.mxu0 0
  %1495 = vmatprep.subr.bf16.mxu0 0
  %1496 = vmatpush1.bf16.msra.mxu0 0
  %1497 = vmatprep.subr.bf16.mxu0 0
  %1498 = vmatpush1.bf16.msra.mxu0 0
  %1499 = vmatprep.subr.bf16.mxu0 0
  %1500 = vmatpush1.bf16.msra.mxu0 0
  %1501 = vmatprep.subr.bf16.mxu0 0
  %1502 = vmatpush1.bf16.msra.mxu0 0
  %1503 = vmatprep.subr.bf16.mxu0 0
  %1504 = vmatpush1.bf16.msra.mxu0 0
  %1505 = vmatprep.subr.bf16.mxu0 0
  %1506 = vmatpush1.bf16.msra.mxu0 0
  %1507 = vmatprep.subr.bf16.mxu0 0
  %1508 = vmatpush1.bf16.msra.mxu0 0
  %1509 = vmatprep.mubr.bf16.mxu0 0
  %1510 = vmatmul.mubr.bf16.gmra.mrb[0].mxu0 %v1229
  %v1511 = vpop.f32.mrb[0].mxu0
  %v1512 = vadd.f32 %v871, %v1511
  %v1513 = vpop.f32.mrb[0].mxu0
  %v1514 = vadd.f32 %v875, %v1513
  %v1515 = vpop.f32.mrb[0].mxu0
  %v1516 = vpop.f32.mrb[0].mxu0
  %1517 = vdwg.mxu0
  %1518 = vmatprep.subr.bf16.mxu0 %v1134
  %1519 = vmatpush1.bf16.msra.mxu0 %v1133
  %1520 = vmatprep.subr.bf16.mxu0 %v1161
  %1521 = vmatpush1.bf16.msra.mxu0 %v1160
  %1522 = vmatprep.subr.bf16.mxu0 0
  %1523 = vmatpush1.bf16.msra.mxu0 0
  %1524 = vmatprep.subr.bf16.mxu0 0
  %1525 = vmatpush1.bf16.msra.mxu0 0
  %1526 = vmatprep.subr.bf16.mxu0 0
  %1527 = vmatpush1.bf16.msra.mxu0 0
  %1528 = vmatprep.subr.bf16.mxu0 0
  %1529 = vmatpush1.bf16.msra.mxu0 0
  %1530 = vmatprep.subr.bf16.mxu0 0
  %1531 = vmatpush1.bf16.msra.mxu0 0
  %1532 = vmatprep.subr.bf16.mxu0 0
  %1533 = vmatpush1.bf16.msra.mxu0 0
  %1534 = vmatprep.subr.bf16.mxu0 0
  %1535 = vmatpush1.bf16.msra.mxu0 0
  %1536 = vmatprep.subr.bf16.mxu0 0
  %1537 = vmatpush1.bf16.msra.mxu0 0
  %1538 = vmatprep.subr.bf16.mxu0 0
  %1539 = vmatpush1.bf16.msra.mxu0 0
  %1540 = vmatprep.subr.bf16.mxu0 0
  %1541 = vmatpush1.bf16.msra.mxu0 0
  %1542 = vmatprep.subr.bf16.mxu0 0
  %1543 = vmatpush1.bf16.msra.mxu0 0
  %1544 = vmatprep.subr.bf16.mxu0 0
  %1545 = vmatpush1.bf16.msra.mxu0 0
  %1546 = vmatprep.subr.bf16.mxu0 0
  %1547 = vmatpush1.bf16.msra.mxu0 0
  %1548 = vmatprep.subr.bf16.mxu0 0
  %1549 = vmatpush1.bf16.msra.mxu0 0
  %1550 = vmatprep.mubr.bf16.mxu0 0
  %1551 = vmatmul.mubr.bf16.gmra.mrb[0].mxu0 %v1229
  %v1552 = vpop.f32.mrb[0].mxu0
  %v1553 = vadd.f32 %v879, %v1552
  %v1554 = vpop.f32.mrb[0].mxu0
  %v1555 = vadd.f32 %v883, %v1554
  %v1556 = vpop.f32.mrb[0].mxu0
  %v1557 = vpop.f32.mrb[0].mxu0
  %1558 = vdwg.mxu0
  %1559 = vmatprep.subr.bf16.mxu0 %v1136
  %1560 = vmatpush1.bf16.msra.mxu0 %v1135
  %1561 = vmatprep.subr.bf16.mxu0 %v1163
  %1562 = vmatpush1.bf16.msra.mxu0 %v1162
  %1563 = vmatprep.subr.bf16.mxu0 0
  %1564 = vmatpush1.bf16.msra.mxu0 0
  %1565 = vmatprep.subr.bf16.mxu0 0
  %1566 = vmatpush1.bf16.msra.mxu0 0
  %1567 = vmatprep.subr.bf16.mxu0 0
  %1568 = vmatpush1.bf16.msra.mxu0 0
  %1569 = vmatprep.subr.bf16.mxu0 0
  %1570 = vmatpush1.bf16.msra.mxu0 0
  %1571 = vmatprep.subr.bf16.mxu0 0
  %1572 = vmatpush1.bf16.msra.mxu0 0
  %1573 = vmatprep.subr.bf16.mxu0 0
  %1574 = vmatpush1.bf16.msra.mxu0 0
  %1575 = vmatprep.subr.bf16.mxu0 0
  %1576 = vmatpush1.bf16.msra.mxu0 0
  %1577 = vmatprep.subr.bf16.mxu0 0
  %1578 = vmatpush1.bf16.msra.mxu0 0
  %1579 = vmatprep.subr.bf16.mxu0 0
  %1580 = vmatpush1.bf16.msra.mxu0 0
  %1581 = vmatprep.subr.bf16.mxu0 0
  %1582 = vmatpush1.bf16.msra.mxu0 0
  %1583 = vmatprep.subr.bf16.mxu0 0
  %1584 = vmatpush1.bf16.msra.mxu0 0
  %1585 = vmatprep.subr.bf16.mxu0 0
  %1586 = vmatpush1.bf16.msra.mxu0 0
  %1587 = vmatprep.subr.bf16.mxu0 0
  %1588 = vmatpush1.bf16.msra.mxu0 0
  %1589 = vmatprep.subr.bf16.mxu0 0
  %1590 = vmatpush1.bf16.msra.mxu0 0
  %1591 = vmatprep.mubr.bf16.mxu0 0
  %1592 = vmatmul.mubr.bf16.gmra.mrb[0].mxu0 %v1229
  %v1593 = vpop.f32.mrb[0].mxu0
  %v1594 = vadd.f32 %v887, %v1593
  %v1595 = vpop.f32.mrb[0].mxu0
  %v1596 = vadd.f32 %v891, %v1595
  %v1597 = vpop.f32.mrb[0].mxu0
  %v1598 = vpop.f32.mrb[0].mxu0
  %1599 = vdwg.mxu0
  %1600 = vmatprep.subr.bf16.mxu0 %v1138
  %1601 = vmatpush1.bf16.msra.mxu0 %v1137
  %1602 = vmatprep.subr.bf16.mxu0 %v1165
  %1603 = vmatpush1.bf16.msra.mxu0 %v1164
  %1604 = vmatprep.subr.bf16.mxu0 0
  %1605 = vmatpush1.bf16.msra.mxu0 0
  %1606 = vmatprep.subr.bf16.mxu0 0
  %1607 = vmatpush1.bf16.msra.mxu0 0
  %1608 = vmatprep.subr.bf16.mxu0 0
  %1609 = vmatpush1.bf16.msra.mxu0 0
  %1610 = vmatprep.subr.bf16.mxu0 0
  %1611 = vmatpush1.bf16.msra.mxu0 0
  %1612 = vmatprep.subr.bf16.mxu0 0
  %1613 = vmatpush1.bf16.msra.mxu0 0
  %1614 = vmatprep.subr.bf16.mxu0 0
  %1615 = vmatpush1.bf16.msra.mxu0 0
  %1616 = vmatprep.subr.bf16.mxu0 0
  %1617 = vmatpush1.bf16.msra.mxu0 0
  %1618 = vmatprep.subr.bf16.mxu0 0
  %1619 = vmatpush1.bf16.msra.mxu0 0
  %1620 = vmatprep.subr.bf16.mxu0 0
  %1621 = vmatpush1.bf16.msra.mxu0 0
  %1622 = vmatprep.subr.bf16.mxu0 0
  %1623 = vmatpush1.bf16.msra.mxu0 0
  %1624 = vmatprep.subr.bf16.mxu0 0
  %1625 = vmatpush1.bf16.msra.mxu0 0
  %1626 = vmatprep.subr.bf16.mxu0 0
  %1627 = vmatpush1.bf16.msra.mxu0 0
  %1628 = vmatprep.subr.bf16.mxu0 0
  %1629 = vmatpush1.bf16.msra.mxu0 0
  %1630 = vmatprep.subr.bf16.mxu0 0
  %1631 = vmatpush1.bf16.msra.mxu0 0
  %1632 = vmatprep.mubr.bf16.mxu0 0
  %1633 = vmatmul.mubr.bf16.gmra.mrb[0].mxu0 %v1229
  %v1634 = vpop.f32.mrb[0].mxu0
  %v1635 = vadd.f32 %v895, %v1634
  %v1636 = vpop.f32.mrb[0].mxu0
  %v1637 = vadd.f32 %v899, %v1636
  %v1638 = vpop.f32.mrb[0].mxu0
  %v1639 = vpop.f32.mrb[0].mxu0
  %1640 = vdwg.mxu0
  %1641 = vmatprep.subr.bf16.mxu0 %v1140
  %1642 = vmatpush1.bf16.msra.mxu0 %v1139
  %1643 = vmatprep.subr.bf16.mxu0 %v1167
  %1644 = vmatpush1.bf16.msra.mxu0 %v1166
  %1645 = vmatprep.subr.bf16.mxu0 0
  %1646 = vmatpush1.bf16.msra.mxu0 0
  %1647 = vmatprep.subr.bf16.mxu0 0
  %1648 = vmatpush1.bf16.msra.mxu0 0
  %1649 = vmatprep.subr.bf16.mxu0 0
  %1650 = vmatpush1.bf16.msra.mxu0 0
  %1651 = vmatprep.subr.bf16.mxu0 0
  %1652 = vmatpush1.bf16.msra.mxu0 0
  %1653 = vmatprep.subr.bf16.mxu0 0
  %1654 = vmatpush1.bf16.msra.mxu0 0
  %1655 = vmatprep.subr.bf16.mxu0 0
  %1656 = vmatpush1.bf16.msra.mxu0 0
  %1657 = vmatprep.subr.bf16.mxu0 0
  %1658 = vmatpush1.bf16.msra.mxu0 0
  %1659 = vmatprep.subr.bf16.mxu0 0
  %1660 = vmatpush1.bf16.msra.mxu0 0
  %1661 = vmatprep.subr.bf16.mxu0 0
  %1662 = vmatpush1.bf16.msra.mxu0 0
  %1663 = vmatprep.subr.bf16.mxu0 0
  %1664 = vmatpush1.bf16.msra.mxu0 0
  %1665 = vmatprep.subr.bf16.mxu0 0
  %1666 = vmatpush1.bf16.msra.mxu0 0
  %1667 = vmatprep.subr.bf16.mxu0 0
  %1668 = vmatpush1.bf16.msra.mxu0 0
  %1669 = vmatprep.subr.bf16.mxu0 0
  %1670 = vmatpush1.bf16.msra.mxu0 0
  %1671 = vmatprep.subr.bf16.mxu0 0
  %1672 = vmatpush1.bf16.msra.mxu0 0
  %1673 = vmatprep.mubr.bf16.mxu0 0
  %1674 = vmatmul.mubr.bf16.gmra.mrb[0].mxu0 %v1229
  %v1675 = vpop.f32.mrb[0].mxu0
  %v1676 = vadd.f32 %v903, %v1675
  %v1677 = vpop.f32.mrb[0].mxu0
  %v1678 = vadd.f32 %v907, %v1677
  %v1679 = vpop.f32.mrb[0].mxu0
  %v1680 = vpop.f32.mrb[0].mxu0
  %1681 = vdwg.mxu0
  %1682 = vmatprep.subr.bf16.mxu0 %v1142
  %1683 = vmatpush1.bf16.msra.mxu0 %v1141
  %1684 = vmatprep.subr.bf16.mxu0 %v1169
  %1685 = vmatpush1.bf16.msra.mxu0 %v1168
  %1686 = vmatprep.subr.bf16.mxu0 0
  %1687 = vmatpush1.bf16.msra.mxu0 0
  %1688 = vmatprep.subr.bf16.mxu0 0
  %1689 = vmatpush1.bf16.msra.mxu0 0
  %1690 = vmatprep.subr.bf16.mxu0 0
  %1691 = vmatpush1.bf16.msra.mxu0 0
  %1692 = vmatprep.subr.bf16.mxu0 0
  %1693 = vmatpush1.bf16.msra.mxu0 0
  %1694 = vmatprep.subr.bf16.mxu0 0
  %1695 = vmatpush1.bf16.msra.mxu0 0
  %1696 = vmatprep.subr.bf16.mxu0 0
  %1697 = vmatpush1.bf16.msra.mxu0 0
  %1698 = vmatprep.subr.bf16.mxu0 0
  %1699 = vmatpush1.bf16.msra.mxu0 0
  %1700 = vmatprep.subr.bf16.mxu0 0
  %1701 = vmatpush1.bf16.msra.mxu0 0
  %1702 = vmatprep.subr.bf16.mxu0 0
  %1703 = vmatpush1.bf16.msra.mxu0 0
  %1704 = vmatprep.subr.bf16.mxu0 0
  %1705 = vmatpush1.bf16.msra.mxu0 0
  %1706 = vmatprep.subr.bf16.mxu0 0
  %1707 = vmatpush1.bf16.msra.mxu0 0
  %1708 = vmatprep.subr.bf16.mxu0 0
  %1709 = vmatpush1.bf16.msra.mxu0 0
  %1710 = vmatprep.subr.bf16.mxu0 0
  %1711 = vmatpush1.bf16.msra.mxu0 0
  %1712 = vmatprep.subr.bf16.mxu0 0
  %1713 = vmatpush1.bf16.msra.mxu0 0
  %1714 = vmatprep.mubr.bf16.mxu0 0
  %1715 = vmatmul.mubr.bf16.gmra.mrb[0].mxu0 %v1229
  %v1716 = vpop.f32.mrb[0].mxu0
  %v1717 = vadd.f32 %v911, %v1716
  %v1718 = vpop.f32.mrb[0].mxu0
  %v1719 = vadd.f32 %v915, %v1718
  %v1720 = vpop.f32.mrb[0].mxu0
  %v1721 = vpop.f32.mrb[0].mxu0
  %1722 = vdwg.mxu0
  %1723 = vmatprep.subr.bf16.mxu0 %v1144
  %1724 = vmatpush1.bf16.msra.mxu0 %v1143
  %1725 = vmatprep.subr.bf16.mxu0 %v1171
  %1726 = vmatpush1.bf16.msra.mxu0 %v1170
  %1727 = vmatprep.subr.bf16.mxu0 0
  %1728 = vmatpush1.bf16.msra.mxu0 0
  %1729 = vmatprep.subr.bf16.mxu0 0
  %1730 = vmatpush1.bf16.msra.mxu0 0
  %1731 = vmatprep.subr.bf16.mxu0 0
  %1732 = vmatpush1.bf16.msra.mxu0 0
  %1733 = vmatprep.subr.bf16.mxu0 0
  %1734 = vmatpush1.bf16.msra.mxu0 0
  %1735 = vmatprep.subr.bf16.mxu0 0
  %1736 = vmatpush1.bf16.msra.mxu0 0
  %1737 = vmatprep.subr.bf16.mxu0 0
  %1738 = vmatpush1.bf16.msra.mxu0 0
  %1739 = vmatprep.subr.bf16.mxu0 0
  %1740 = vmatpush1.bf16.msra.mxu0 0
  %1741 = vmatprep.subr.bf16.mxu0 0
  %1742 = vmatpush1.bf16.msra.mxu0 0
  %1743 = vmatprep.subr.bf16.mxu0 0
  %1744 = vmatpush1.bf16.msra.mxu0 0
  %1745 = vmatprep.subr.bf16.mxu0 0
  %1746 = vmatpush1.bf16.msra.mxu0 0
  %1747 = vmatprep.subr.bf16.mxu0 0
  %1748 = vmatpush1.bf16.msra.mxu0 0
  %1749 = vmatprep.subr.bf16.mxu0 0
  %1750 = vmatpush1.bf16.msra.mxu0 0
  %1751 = vmatprep.subr.bf16.mxu0 0
  %1752 = vmatpush1.bf16.msra.mxu0 0
  %1753 = vmatprep.subr.bf16.mxu0 0
  %1754 = vmatpush1.bf16.msra.mxu0 0
  %1755 = vmatprep.mubr.bf16.mxu0 0
  %1756 = vmatmul.mubr.bf16.gmra.mrb[0].mxu0 %v1229
  %v1757 = vpop.f32.mrb[0].mxu0
  %v1758 = vadd.f32 %v919, %v1757
  %v1759 = vpop.f32.mrb[0].mxu0
  %v1760 = vadd.f32 %v923, %v1759
  %v1761 = vpop.f32.mrb[0].mxu0
  %v1762 = vpop.f32.mrb[0].mxu0
  %1763 = vdwg.mxu0
  %1764 = vmatprep.subr.bf16.mxu0 0
  %1765 = vmatpush1.bf16.msra.mxu0 %v1145
  %1766 = vmatprep.subr.bf16.mxu0 0
  %1767 = vmatpush1.bf16.msra.mxu0 %v1172
  %1768 = vmatprep.subr.bf16.mxu0 0
  %1769 = vmatpush1.bf16.msra.mxu0 0
  %1770 = vmatprep.subr.bf16.mxu0 0
  %1771 = vmatpush1.bf16.msra.mxu0 0
  %1772 = vmatprep.subr.bf16.mxu0 0
  %1773 = vmatpush1.bf16.msra.mxu0 0
  %1774 = vmatprep.subr.bf16.mxu0 0
  %1775 = vmatpush1.bf16.msra.mxu0 0
  %1776 = vmatprep.subr.bf16.mxu0 0
  %1777 = vmatpush1.bf16.msra.mxu0 0
  %1778 = vmatprep.subr.bf16.mxu0 0
  %1779 = vmatpush1.bf16.msra.mxu0 0
  %1780 = vmatprep.subr.bf16.mxu0 0
  %1781 = vmatpush1.bf16.msra.mxu0 0
  %1782 = vmatprep.subr.bf16.mxu0 0
  %1783 = vmatpush1.bf16.msra.mxu0 0
  %1784 = vmatprep.subr.bf16.mxu0 0
  %1785 = vmatpush1.bf16.msra.mxu0 0
  %1786 = vmatprep.subr.bf16.mxu0 0
  %1787 = vmatpush1.bf16.msra.mxu0 0
  %1788 = vmatprep.subr.bf16.mxu0 0
  %1789 = vmatpush1.bf16.msra.mxu0 0
  %1790 = vmatprep.subr.bf16.mxu0 0
  %1791 = vmatpush1.bf16.msra.mxu0 0
  %1792 = vmatprep.subr.bf16.mxu0 0
  %1793 = vmatpush1.bf16.msra.mxu0 0
  %1794 = vmatprep.subr.bf16.mxu0 0
  %1795 = vmatpush1.bf16.msra.mxu0 0
  %1796 = vmatprep.mubr.bf16.mxu0 0
  %1797 = vmatmul.mubr.bf16.gmra.mrb[0].mxu0 %v1229
  %v1798 = vpop.f32.mrb[0].mxu0
  %v1799 = vadd.f32 %v927, %v1798
  %v1800 = vpop.f32.mrb[0].mxu0
  %v1801 = vpop.f32.mrb[0].mxu0
  %v1802 = vpop.f32.mrb[0].mxu0
  %1803 = vdwg.mxu0
  %v1804 = vmax.f32 %v1266, 0.0
  %v1805 = vmax.f32 %v1268, 0.0
  %v1806 = vmax.f32 %v1307, 0.0
  %v1807 = vmax.f32 %v1309, 0.0
  %v1808 = vmax.f32 %v1348, 0.0
  %v1809 = vmax.f32 %v1350, 0.0
  %v1810 = vmax.f32 %v1389, 0.0
  %v1811 = vmax.f32 %v1391, 0.0
  %v1812 = vmax.f32 %v1430, 0.0
  %v1813 = vmax.f32 %v1432, 0.0
  %v1814 = vmax.f32 %v1471, 0.0
  %v1815 = vmax.f32 %v1473, 0.0
  %v1816 = vmax.f32 %v1512, 0.0
  %v1817 = vmax.f32 %v1514, 0.0
  %v1818 = vmax.f32 %v1553, 0.0
  %v1819 = vmax.f32 %v1555, 0.0
  %v1820 = vmax.f32 %v1594, 0.0
  %v1821 = vmax.f32 %v1596, 0.0
  %v1822 = vmax.f32 %v1635, 0.0
  %v1823 = vmax.f32 %v1637, 0.0
  %v1824 = vmax.f32 %v1676, 0.0
  %v1825 = vmax.f32 %v1678, 0.0
  %v1826 = vmax.f32 %v1717, 0.0
  %v1827 = vmax.f32 %v1719, 0.0
  %v1828 = vmax.f32 %v1758, 0.0
  %v1829 = vmax.f32 %v1760, 0.0
  %v1830 = vmax.f32 %v1799, 0.0
  %v1858 = vcombine.low %v1804, %v1805
  %v1859 = vcombine.low %v1806, %v1807
  %v1861 = vunpack.c.l.s4 1983009808
  %v1862 = vunpack.c.0.s8 %v1861
  %v1863 = vlaneseq
  %v1864 = vshrl.u32 %v1863, 7
  %v1865 = vsub.s32 %v1862, %v1864
  %v1866 = vrot.slane %v1858, %v1865
  %v1868 = vunpack.c.l.s4 1983009808
  %v1869 = vunpack.c.0.s8 %v1868
  %v1870 = vlaneseq
  %v1871 = vshrl.u32 %v1870, 7
  %v1872 = vsub.s32 %v1869, %v1871
  %v1873 = vrot.slane %v1859, %v1872
  %v1874 = vcombine.low %v1866, %v1873
  %v1875 = vcombine.low %v1808, %v1809
  %v1876 = vcombine.low %v1810, %v1811
  %v1878 = vunpack.c.l.s4 1983009808
  %v1879 = vunpack.c.0.s8 %v1878
  %v1880 = vlaneseq
  %v1881 = vshrl.u32 %v1880, 7
  %v1882 = vsub.s32 %v1879, %v1881
  %v1883 = vrot.slane %v1875, %v1882
  %v1885 = vunpack.c.l.s4 1983009808
  %v1886 = vunpack.c.0.s8 %v1885
  %v1887 = vlaneseq
  %v1888 = vshrl.u32 %v1887, 7
  %v1889 = vsub.s32 %v1886, %v1888
  %v1890 = vrot.slane %v1876, %v1889
  %v1891 = vcombine.low %v1883, %v1890
  %v1892 = vcombine.low %v1812, %v1813
  %v1893 = vcombine.low %v1814, %v1815
  %v1895 = vunpack.c.l.s4 1983009808
  %v1896 = vunpack.c.0.s8 %v1895
  %v1897 = vlaneseq
  %v1898 = vshrl.u32 %v1897, 7
  %v1899 = vsub.s32 %v1896, %v1898
  %v1900 = vrot.slane %v1892, %v1899
  %v1902 = vunpack.c.l.s4 1983009808
  %v1903 = vunpack.c.0.s8 %v1902
  %v1904 = vlaneseq
  %v1905 = vshrl.u32 %v1904, 7
  %v1906 = vsub.s32 %v1903, %v1905
  %v1907 = vrot.slane %v1893, %v1906
  %v1908 = vcombine.low %v1900, %v1907
  %v1909 = vcombine.low %v1816, %v1817
  %v1910 = vcombine.low %v1818, %v1819
  %v1912 = vunpack.c.l.s4 1983009808
  %v1913 = vunpack.c.0.s8 %v1912
  %v1914 = vlaneseq
  %v1915 = vshrl.u32 %v1914, 7
  %v1916 = vsub.s32 %v1913, %v1915
  %v1917 = vrot.slane %v1909, %v1916
  %v1919 = vunpack.c.l.s4 1983009808
  %v1920 = vunpack.c.0.s8 %v1919
  %v1921 = vlaneseq
  %v1922 = vshrl.u32 %v1921, 7
  %v1923 = vsub.s32 %v1920, %v1922
  %v1924 = vrot.slane %v1910, %v1923
  %v1925 = vcombine.low %v1917, %v1924
  %v1926 = vcombine.low %v1820, %v1821
  %v1927 = vcombine.low %v1822, %v1823
  %v1929 = vunpack.c.l.s4 1983009808
  %v1930 = vunpack.c.0.s8 %v1929
  %v1931 = vlaneseq
  %v1932 = vshrl.u32 %v1931, 7
  %v1933 = vsub.s32 %v1930, %v1932
  %v1934 = vrot.slane %v1926, %v1933
  %v1936 = vunpack.c.l.s4 1983009808
  %v1937 = vunpack.c.0.s8 %v1936
  %v1938 = vlaneseq
  %v1939 = vshrl.u32 %v1938, 7
  %v1940 = vsub.s32 %v1937, %v1939
  %v1941 = vrot.slane %v1927, %v1940
  %v1942 = vcombine.low %v1934, %v1941
  %v1943 = vcombine.low %v1824, %v1825
  %v1944 = vcombine.low %v1826, %v1827
  %v1946 = vunpack.c.l.s4 1983009808
  %v1947 = vunpack.c.0.s8 %v1946
  %v1948 = vlaneseq
  %v1949 = vshrl.u32 %v1948, 7
  %v1950 = vsub.s32 %v1947, %v1949
  %v1951 = vrot.slane %v1943, %v1950
  %v1953 = vunpack.c.l.s4 1983009808
  %v1954 = vunpack.c.0.s8 %v1953
  %v1955 = vlaneseq
  %v1956 = vshrl.u32 %v1955, 7
  %v1957 = vsub.s32 %v1954, %v1956
  %v1958 = vrot.slane %v1944, %v1957
  %v1959 = vcombine.low %v1951, %v1958
  %v1960 = vcombine.low %v1828, %v1829
  %v1962 = vunpack.c.l.s4 1983009808
  %v1963 = vunpack.c.0.s8 %v1962
  %v1964 = vlaneseq
  %v1965 = vshrl.u32 %v1964, 7
  %v1966 = vsub.s32 %v1963, %v1965
  %v1967 = vrot.slane %v1960, %v1966
  %v1969 = vunpack.c.l.s4 1983009808
  %v1970 = vunpack.c.0.s8 %v1969
  %v1971 = vlaneseq
  %v1972 = vshrl.u32 %v1971, 7
  %v1973 = vsub.s32 %v1970, %v1972
  %v1974 = vrot.slane %v1830, %v1973
  %v1975 = vcombine.low %v1967, %v1974
  %1983 = vst [vmem:[%s5] sm:$0xff] %v1874
  %1984 = vst [vmem:[%s5 + $0x8] sm:$0xff] %v1891
  %1985 = vst [vmem:[%s5 + $0x10] sm:$0xff] %v1908
  %1986 = vst [vmem:[%s5 + $0x18] sm:$0xff] %v1925
  %1987 = vst [vmem:[%s5 + $0x20] sm:$0xff] %v1942
  %1988 = vst [vmem:[%s5 + $0x28] sm:$0xff] %v1959
  %1989 = vst [vmem:[%s5 + $0x30] sm:$0x3f] %v1975
  // Predicated region
  $region22: #{simple_forward.1} parent=0 // pred_check
    _
  $region23: #{simple_forward.1} parent=0 // pred_check_branch
    %1991 = sbr.rel (0) target = $region25
  $region24: #{simple_forward.1} parent=0 // pred_region
    _
  $region25: #{simple_forward.1} parent=0 // pred_fallthru
    _
  // Predicated region
  $region26: #{simple_forward.1} parent=0 // pred_check
    _
  $region27: #{simple_forward.1} parent=0 // pred_check_branch
    %1993 = sbr.rel (0) target = $region29
  $region28: #{simple_forward.1} parent=0 // pred_region
    _
  $region29: #{simple_forward.1} parent=0 // pred_fallthru
    _

</llo_original>
